<compile_context>
chip_gen: v6e
topology: v6e:2x2x1
jax: 0.10.0
libtpu: 0.0.40
codegen_flags: <defaults>
</compile_context>

<pallas_src>
import functools
import math

import jax
import jax.numpy as jnp
from jax import lax
from jax.experimental import pallas as pl
from jax.experimental.pallas import tpu as pltpu


def _pca_kernel(p_ref, wqkv_ref, bqkv_ref, attn_ref, ctx_ref,
                q_sc, k_sc, v_sc, *, cp, tq):
    # p_ref:    (1, HW, K)      full patches for this batch element
    # wqkv_ref: (K, 3*Cp)       fused [Wq*s | Wk | Wv] (zero-padded to Cp)
    # bqkv_ref: (1, 3*Cp)       fused [bq*s | bk | bv]
    # attn_ref: (1, TQ, HW)     attention rows for this q-tile
    # ctx_ref:  (1, TQ, Cp)     context rows (lane-padded), sliced on host
    # q_sc/k_sc/v_sc: (HW, Cp)  per-batch projections, persist across q-tiles
    qi = pl.program_id(1)

    # Project q/k/v once per batch element (first q-tile); the scratch stays
    # resident in VMEM for the remaining q-tiles of this batch element.
    @pl.when(qi == 0)
    def _():
        p = p_ref[0]                                                # (HW, K)
        qkv = jnp.dot(p, wqkv_ref[...],
                      preferred_element_type=jnp.float32) + bqkv_ref[...]
        q_sc[...] = qkv[:, :cp]            # already scaled by 1/sqrt(C_out)
        k_sc[...] = qkv[:, cp:2 * cp]
        v_sc[...] = qkv[:, 2 * cp:]

    row0 = pl.multiple_of(qi * tq, tq)
    q_t = q_sc[pl.ds(row0, tq), :]                                  # (TQ, Cp)

    # scores = q_t @ k^T  (transposed-RHS contraction, no k.T copy).
    scores = lax.dot_general(
        q_t, k_sc[...],
        dimension_numbers=(((1,), (1,)), ((), ())),
        preferred_element_type=jnp.float32)                         # (TQ, HW)

    # Max-stabilized softmax; one reciprocal per row instead of a full divide.
    m = jnp.max(scores, axis=-1, keepdims=True)
    e = jnp.exp(scores - m)
    denom = jnp.sum(e, axis=-1, keepdims=True)
    attn = e * pl.reciprocal(denom, approx=False)                   # (TQ, HW)

    attn_ref[0] = attn.astype(attn_ref.dtype)

    # ctx rows for this q-tile; last dim is Cp (=128-lane dense).
    ctx = jnp.dot(attn, v_sc[...], preferred_element_type=jnp.float32)
    ctx_ref[0] = ctx.astype(ctx_ref.dtype)                          # (TQ, Cp)


def _im2col_3x3(x):
    """x: (B, C_in, H, W) -> patches (B, H*W, 9*C_in), ordering (kh, kw, c_in)."""
    B, C, H, W = x.shape
    xp = jnp.pad(x, ((0, 0), (0, 0), (1, 1), (1, 1)))
    slices = [xp[:, :, kh:kh + H, kw:kw + W]           # each (B, C, H, W)
              for kh in range(3) for kw in range(3)]
    patches = jnp.stack(slices, axis=1)                # (B, 9, C, H, W)
    patches = patches.transpose(0, 3, 4, 1, 2)         # (B, H, W, 9, C)
    return patches.reshape(B, H * W, 9 * C)


def pca_projector(x, params, *, tq=None):
    """Forward pass of PCAProjector.

    x: (B, C_in, H, W) float32 (NCHW, same as PyTorch).
    params: dict with 'wq','wk','wv' of shape (C_out, C_in, 3, 3) and
            'bq','bk','bv' of shape (C_out,).
    Returns (attn, ctx): attn (B, HW, HW), ctx (B, C_out, H, W).
    """
    B, C_in, H, W = x.shape
    C_out = params["wq"].shape[0]
    HW = H * W
    K = 9 * C_in
    Cp = ((C_out + 127) // 128) * 128 if C_out > 128 else 128   # lane-pad C_out

    # Query tile: prefer a 128-multiple that divides HW (lane-dense blocks).
    if tq is None:
        tq = HW
        for cand in (512, 256, 128):
            if HW % cand == 0:
                tq = cand
                break
    n_q = HW // tq

    patches = _im2col_3x3(x)                                    # (B, HW, K)

    inv_sqrt_c = 1.0 / math.sqrt(C_out)   # matches k.size(1) in PyTorch

    def to_mat(w, scale=1.0):
        # (C_out, C_in, 3, 3) -> (K, Cp), ordering (kh, kw, c_in); zero-pad lanes.
        m = jnp.transpose(w, (2, 3, 1, 0)).reshape(K, C_out) * scale
        return jnp.pad(m, ((0, 0), (0, Cp - C_out)))

    def to_bias(b, scale=1.0):
        return jnp.pad(b * scale, (0, Cp - C_out))

    # Fold the softmax scale into the q projection (free in-kernel).
    wqkv = jnp.concatenate(
        [to_mat(params["wq"], inv_sqrt_c), to_mat(params["wk"]), to_mat(params["wv"])],
        axis=1)                                                  # (K, 3*Cp)
    bqkv = jnp.concatenate(
        [to_bias(params["bq"], inv_sqrt_c), to_bias(params["bk"]), to_bias(params["bv"])]
    ).reshape(1, 3 * Cp)                                         # (1, 3*Cp)

    kernel = functools.partial(_pca_kernel, cp=Cp, tq=tq)

    attn, ctx_pad = pl.pallas_call(
        kernel,
        out_shape=(
            jax.ShapeDtypeStruct((B, HW, HW), jnp.float32),
            jax.ShapeDtypeStruct((B, HW, Cp), jnp.float32),
        ),
        grid=(B, n_q),
        in_specs=[
            # Full patches per batch element; index map constant in qi, so the
            # block is DMA'd once per batch element and reused across q-tiles.
            pl.BlockSpec((1, HW, K), lambda b, qi: (b, 0, 0)),
            pl.BlockSpec((K, 3 * Cp), lambda b, qi: (0, 0)),     # fused weights
            pl.BlockSpec((1, 3 * Cp), lambda b, qi: (0, 0)),     # fused bias
        ],
        out_specs=(
            pl.BlockSpec((1, tq, HW), lambda b, qi: (b, qi, 0)),  # attn rows
            pl.BlockSpec((1, tq, Cp), lambda b, qi: (b, qi, 0)),  # ctx rows
        ),
        scratch_shapes=[
            pltpu.VMEM((HW, Cp), jnp.float32),   # q (pre-scaled)
            pltpu.VMEM((HW, Cp), jnp.float32),   # k
            pltpu.VMEM((HW, Cp), jnp.float32),   # v
        ],
        compiler_params=pltpu.CompilerParams(
            dimension_semantics=("parallel", "arbitrary"),
            vmem_limit_bytes=32 * 1024 * 1024,
        ),
    )(patches, wqkv, bqkv)

    # (B, HW, Cp) -> (B, C_out, H, W): slice off lane padding, then permute/view
    # (tiny XLA ops on the un-padded ctx).
    ctx = ctx_pad[:, :, :C_out].transpose(0, 2, 1).reshape(B, C_out, H, W)
    return attn, ctx


def _reference(x, params):
    """Pure-JAX reference mirroring the PyTorch forward."""
    B, C_in, H, W = x.shape
    C_out = params["wq"].shape[0]

    def conv(w, b):
        y = lax.conv_general_dilated(
            x, w, window_strides=(1, 1), padding=((1, 1), (1, 1)),
            dimension_numbers=("NCHW", "OIHW", "NCHW"))
        return y + b.reshape(1, C_out, 1, 1)

    q = conv(params["wq"], params["bq"]).reshape(B, C_out, H * W).transpose(0, 2, 1)
    k = conv(params["wk"], params["bk"]).reshape(B, C_out, H * W)
    v = conv(params["wv"], params["bv"]).reshape(B, C_out, H * W).transpose(0, 2, 1)
    attn = jnp.einsum("bnc,bcm->bnm", q, k) / math.sqrt(C_out)
    attn = jax.nn.softmax(attn, axis=-1)
    ctx = jnp.einsum("bnm,bmc->bnc", attn, v)
    ctx = ctx.transpose(0, 2, 1).reshape(B, C_out, H, W)
    return attn, ctx


def _init_params(key, c_in, c_out):
    ks = jax.random.split(key, 6)
    fan_in = c_in * 9
    bound = 1.0 / math.sqrt(fan_in)
    u = lambda k, shape: jax.random.uniform(k, shape, jnp.float32, -bound, bound)
    return {
        "wq": u(ks[0], (c_out, c_in, 3, 3)), "bq": u(ks[1], (c_out,)),
        "wk": u(ks[2], (c_out, c_in, 3, 3)), "bk": u(ks[3], (c_out,)),
        "wv": u(ks[4], (c_out, c_in, 3, 3)), "bv": u(ks[5], (c_out,)),
    }


if __name__ == "__main__":
    key = jax.random.PRNGKey(0)
    k_x, k_p = jax.random.split(key)

    B, C_in, H, W = 2, 4, 16, 16
    x = jax.random.normal(k_x, (B, C_in, H, W), dtype=jnp.float32)
    params = _init_params(k_p, C_in, C_in)  # out_channels defaults to in_channels

    attn, ctx = jax.jit(pca_projector)(x, params)
    jax.block_until_ready((attn, ctx))

    attn_ref, ctx_ref = _reference(x, params)
    assert attn.shape == (B, H * W, H * W) and ctx.shape == (B, C_in, H, W)
    assert jnp.allclose(attn, attn_ref, atol=1e-5, rtol=1e-5)
    assert jnp.allclose(ctx, ctx_ref, atol=1e-4, rtol=1e-4)

    print("KERNEL_OK")
</pallas_src>

<mosaic_0001>
module attributes {stable_mosaic.version = 11 : i64} {
  func.func @_pca_kernel(%arg0: i32, %arg1: i32, %arg2: memref<1x256x36xf32, #tpu.memory_space<vmem>>, %arg3: memref<36x384xf32, #tpu.memory_space<vmem>>, %arg4: memref<1x384xf32, #tpu.memory_space<vmem>>, %arg5: memref<1x256x256xf32, #tpu.memory_space<vmem>>, %arg6: memref<1x256x128xf32, #tpu.memory_space<vmem>>, %arg7: memref<256x128xf32, #tpu.memory_space<vmem>>, %arg8: memref<256x128xf32, #tpu.memory_space<vmem>>, %arg9: memref<256x128xf32, #tpu.memory_space<vmem>>) attributes {dimension_semantics = [#tpu.dimension_semantics<parallel>, #tpu.dimension_semantics<arbitrary>], iteration_bounds = array<i64: 2, 1>, scalar_prefetch = 0 : i64, scratch_operands = 3 : i64, tpu.core_type = #tpu.core_type<tc>, window_params = [{transform_indices = @transform_0, window_bounds = array<i64: 1, 256, 36>}, {pipeline_mode = #tpu.pipeline_mode<synchronous>, transform_indices = @transform_1, window_bounds = array<i64: 36, 384>}, {pipeline_mode = #tpu.pipeline_mode<synchronous>, transform_indices = @transform_2, window_bounds = array<i64: 1, 384>}, {transform_indices = @transform_3, window_bounds = array<i64: 1, 256, 256>}, {transform_indices = @transform_4, window_bounds = array<i64: 1, 256, 128>}]} {
    %c0_i32 = arith.constant 0 : i32
    %0 = arith.cmpi eq, %arg1, %c0_i32 : i32
    %1 = arith.extui %0 : i1 to i32
    %c0_i32_0 = arith.constant 0 : i32
    %2 = arith.cmpi ne, %1, %c0_i32_0 : i32
    scf.if %2 {
      %c0_14 = arith.constant 0 : index
      %c0_15 = arith.constant 0 : index
      %c0_16 = arith.constant 0 : index
      %27 = vector.load %arg2[%c0_14, %c0_15, %c0_16] : memref<1x256x36xf32, #tpu.memory_space<vmem>>, vector<1x256x36xf32>
      %28 = vector.shape_cast %27 : vector<1x256x36xf32> to vector<256x36xf32>
      %c0_17 = arith.constant 0 : index
      %c0_18 = arith.constant 0 : index
      %29 = vector.load %arg3[%c0_17, %c0_18] : memref<36x384xf32, #tpu.memory_space<vmem>>, vector<36x384xf32>
      %cst_19 = arith.constant dense<0.000000e+00> : vector<256x384xf32>
      %30 = tpu.matmul %28, %29, %cst_19 {dimension_numbers = #tpu.dot_dimension_numbers<[1], [0], [0], [1], [0, 0, 1, 1], [], []>} : vector<256x36xf32>, vector<36x384xf32>, vector<256x384xf32> -> vector<256x384xf32>
      %c0_20 = arith.constant 0 : index
      %c0_21 = arith.constant 0 : index
      %31 = vector.load %arg4[%c0_20, %c0_21] : memref<1x384xf32, #tpu.memory_space<vmem>>, vector<1x384xf32>
      %32 = vector.broadcast %31 : vector<1x384xf32> to vector<256x384xf32>
      %33 = arith.addf %30, %32 : vector<256x384xf32>
      %34 = vector.extract_strided_slice %33 {offsets = [0, 0], sizes = [256, 128], strides = [1, 1]} : vector<256x384xf32> to vector<256x128xf32>
      %c0_22 = arith.constant 0 : index
      %c0_23 = arith.constant 0 : index
      %35 = vector.load %arg7[%c0_22, %c0_23] : memref<256x128xf32, #tpu.memory_space<vmem>>, vector<256x128xf32>
      tpu.vector_store %arg7[%c0_22, %c0_23], %34 {strides = array<i32>} : memref<256x128xf32, #tpu.memory_space<vmem>>, vector<256x128xf32>,
      %36 = vector.extract_strided_slice %33 {offsets = [0, 128], sizes = [256, 128], strides = [1, 1]} : vector<256x384xf32> to vector<256x128xf32>
      %c0_24 = arith.constant 0 : index
      %c0_25 = arith.constant 0 : index
      %37 = vector.load %arg8[%c0_24, %c0_25] : memref<256x128xf32, #tpu.memory_space<vmem>>, vector<256x128xf32>
      tpu.vector_store %arg8[%c0_24, %c0_25], %36 {strides = array<i32>} : memref<256x128xf32, #tpu.memory_space<vmem>>, vector<256x128xf32>,
      %38 = vector.extract_strided_slice %33 {offsets = [0, 256], sizes = [256, 128], strides = [1, 1]} : vector<256x384xf32> to vector<256x128xf32>
      %c0_26 = arith.constant 0 : index
      %c0_27 = arith.constant 0 : index
      %39 = vector.load %arg9[%c0_26, %c0_27] : memref<256x128xf32, #tpu.memory_space<vmem>>, vector<256x128xf32>
      tpu.vector_store %arg9[%c0_26, %c0_27], %38 {strides = array<i32>} : memref<256x128xf32, #tpu.memory_space<vmem>>, vector<256x128xf32>,
    } else {
    }
    %c256_i32 = arith.constant 256 : i32
    %3 = arith.muli %arg1, %c256_i32 : i32
    %4 = tpu.assume_multiple %3, 256 : i32
    %5 = arith.index_cast %4 : i32 to index
    %c0 = arith.constant 0 : index
    %6 = vector.load %arg7[%5, %c0] : memref<256x128xf32, #tpu.memory_space<vmem>>, vector<256x128xf32>
    %c0_1 = arith.constant 0 : index
    %c0_2 = arith.constant 0 : index
    %7 = vector.load %arg8[%c0_1, %c0_2] : memref<256x128xf32, #tpu.memory_space<vmem>>, vector<256x128xf32>
    %cst = arith.constant dense<0.000000e+00> : vector<256x256xf32>
    %8 = tpu.matmul %6, %7, %cst {dimension_numbers = #tpu.dot_dimension_numbers<[1], [1], [0], [0], [0, 0, 1, 0], [], []>} : vector<256x128xf32>, vector<256x128xf32>, vector<256x256xf32> -> vector<256x256xf32>
    %cst_3 = arith.constant dense<0xFF800000> : vector<256xf32>
    %9 = vector.multi_reduction <maximumf>, %8, %cst_3 [1] : vector<256x256xf32> to vector<256xf32>
    %10 = vector.shape_cast %9 : vector<256xf32> to vector<256x1xf32>
    %11 = vector.broadcast %10 : vector<256x1xf32> to vector<256x256xf32>
    %12 = arith.subf %8, %11 : vector<256x256xf32>
    %13 = math.exp %12 : vector<256x256xf32>
    %cst_4 = arith.constant dense<0.000000e+00> : vector<256xf32>
    %14 = vector.multi_reduction <add>, %13, %cst_4 [1] : vector<256x256xf32> to vector<256xf32>
    %15 = vector.shape_cast %14 : vector<256xf32> to vector<256x1xf32>
    %16 = tpu.reciprocal %15 : vector<256x1xf32> -> vector<256x1xf32>
    %17 = vector.broadcast %16 : vector<256x1xf32> to vector<256x256xf32>
    %18 = arith.mulf %13, %17 : vector<256x256xf32>
    %c0_5 = arith.constant 0 : index
    %c0_6 = arith.constant 0 : index
    %c0_7 = arith.constant 0 : index
    %19 = vector.load %arg5[%c0_5, %c0_6, %c0_7] : memref<1x256x256xf32, #tpu.memory_space<vmem>>, vector<1x256x256xf32>
    %20 = vector.shape_cast %19 : vector<1x256x256xf32> to vector<256x256xf32>
    %21 = vector.shape_cast %18 : vector<256x256xf32> to vector<1x256x256xf32>
    tpu.vector_store %arg5[%c0_5, %c0_6, %c0_7], %21 {strides = array<i32>} : memref<1x256x256xf32, #tpu.memory_space<vmem>>, vector<1x256x256xf32>,
    %c0_8 = arith.constant 0 : index
    %c0_9 = arith.constant 0 : index
    %22 = vector.load %arg9[%c0_8, %c0_9] : memref<256x128xf32, #tpu.memory_space<vmem>>, vector<256x128xf32>
    %cst_10 = arith.constant dense<0.000000e+00> : vector<256x128xf32>
    %23 = tpu.matmul %18, %22, %cst_10 {dimension_numbers = #tpu.dot_dimension_numbers<[1], [0], [0], [1], [0, 0, 1, 1], [], []>} : vector<256x256xf32>, vector<256x128xf32>, vector<256x128xf32> -> vector<256x128xf32>
    %c0_11 = arith.constant 0 : index
    %c0_12 = arith.constant 0 : index
    %c0_13 = arith.constant 0 : index
    %24 = vector.load %arg6[%c0_11, %c0_12, %c0_13] : memref<1x256x128xf32, #tpu.memory_space<vmem>>, vector<1x256x128xf32>
    %25 = vector.shape_cast %24 : vector<1x256x128xf32> to vector<256x128xf32>
    %26 = vector.shape_cast %23 : vector<256x128xf32> to vector<1x256x128xf32>
    tpu.vector_store %arg6[%c0_11, %c0_12, %c0_13], %26 {strides = array<i32>} : memref<1x256x128xf32, #tpu.memory_space<vmem>>, vector<1x256x128xf32>,
    return
  }
  func.func @transform_0(%arg0: i32, %arg1: i32) -> (i32, i32, i32) {
    %c0_i32 = arith.constant 0 : i32
    %c0_i32_0 = arith.constant 0 : i32
    %c0_i32_1 = arith.constant 0 : i32
    return %arg0, %c0_i32, %c0_i32_0 : i32, i32, i32
  }
  func.func @transform_1(%arg0: i32, %arg1: i32) -> (i32, i32) {
    %c0_i32 = arith.constant 0 : i32
    %c0_i32_0 = arith.constant 0 : i32
    %c0_i32_1 = arith.constant 0 : i32
    return %c0_i32, %c0_i32_0 : i32, i32
  }
  func.func @transform_2(%arg0: i32, %arg1: i32) -> (i32, i32) {
    %c0_i32 = arith.constant 0 : i32
    %c0_i32_0 = arith.constant 0 : i32
    %c0_i32_1 = arith.constant 0 : i32
    return %c0_i32, %c0_i32_0 : i32, i32
  }
  func.func @transform_3(%arg0: i32, %arg1: i32) -> (i32, i32, i32) {
    %c0_i32 = arith.constant 0 : i32
    %c0_i32_0 = arith.constant 0 : i32
    return %arg0, %arg1, %c0_i32 : i32, i32, i32
  }
  func.func @transform_4(%arg0: i32, %arg1: i32) -> (i32, i32, i32) {
    %c0_i32 = arith.constant 0 : i32
    %c0_i32_0 = arith.constant 0 : i32
    return %arg0, %arg1, %c0_i32 : i32, i32, i32
  }
}

</mosaic_0001>

<llo_original>
// kernel: pca_projector.1
$region0: #{pca_projector.1}
  #allocation0 [shape = 'u32[]', space=smem, size = 0x4, offset = 0x4, fixed_abs, tag = 'smem constant byte address 0x4 - core index']
  #allocation1 [shape = 'u32[144,128]{1,0:T(1,128)}', space=vmem, size = 0x12000, scoped, tag = 'internal scratch']
  #allocation2 [shape = 'f32[256,128]{1,0:T(8,128)}', space=vmem, size = 0x20000, scoped, tag = 'scratch operand']
  #allocation3 [shape = 'f32[256,128]{1,0:T(8,128)}', space=vmem, size = 0x20000, scoped, tag = 'scratch operand']
  #allocation4 [shape = 'f32[256,128]{1,0:T(8,128)}', space=vmem, size = 0x20000, scoped, tag = 'scratch operand']
  %s0 = inlined_call_operand.vmem [shape: f32[2,256,36], index: 0, kind: input, shape index: {}]
  %s1 = inlined_call_operand.vmem [shape: f32[36,384], index: 1, kind: input, shape index: {}]
  %s2 = inlined_call_operand.vmem [shape: f32[1,384], index: 2, kind: input, shape index: {}]
  %s3 = inlined_call_operand.hbm [shape: f32[2,256,256], index: 3, kind: output, shape index: {0}]
  %s4 = inlined_call_operand.vmem [shape: f32[2,256,128], index: 4, kind: output, shape index: {1}]
  %5 = xla_tuple %s3, %s4
  %s6 = sld [smem:[#allocation0]]
  $region57: #{pca_projector.1} parent=0
    _
  %s8 = ssub.s32 1, %s6
  %s9 = scalar_select 0, %s8, %s6
  $region1: #{pca_projector.1} parent=0
    #allocation5 [shape = 'u8[524288]{0}', space=vmem, size = 0x80000, scoped, tag = 'output window, operand 0']
    #allocation6 [shape = 's32[2]{0}', space=sflag, size = 0x8, scoped, tag = 'scoped memory for pca_projector.1']
    %10 = vsyncpa [#allocation6], 0
    %s11 = scalar_lea.sflag [#allocation6], 1
    %12 = vsyncpa %s11, 0
    loop: start=0, step=1, limit=4
    $region2: #{pca_projector.1} parent=1 // loop_pre_header
      _
    $region3: #{pca_projector.1} parent=1 // loop_header
      %s14 = sphi 0, %s18
      %p15 = scmp.ge.s32.totalorder %s14, 4
      %s21 = sphi 0, %s33
      %s22 = sphi 0, %s29
      %s23 = sphi 0, %s21
      %s24 = sphi 0, %s22
      %s25 = sphi 0, %s23
      %s26 = sphi 0, %s24
      %s36 = sphi 0, %s38
      %s39 = sphi 0, %s36
      %s40 = sphi 0, %s39
      %s56 = sphi 0, %s40
      %s60 = sphi 0, %s60
      %s62 = sphi 0, %s60
      %s63 = sphi 0, %s62
      %s77 = sphi 0, %s63
      %s81 = sphi 0, %s81
      %s83 = sphi 0, %s81
      %s84 = sphi 0, %s83
      %s98 = sphi 0, %s84
      %s106 = sphi 0, %s108
      %s109 = sphi 0, %s106
      %s110 = sphi 0, %s109
      %s126 = sphi 0, %s110
      %s134 = sphi 0, %s136
      %s137 = sphi 0, %s134
      %s138 = sphi 0, %s137
      %s154 = sphi 0, %s138
    $region4: #{pca_projector.1} parent=1 // loop_header_branch
      %17 = sbr.rel (%p15) target = $region8
    $region5: #{pca_projector.1} parent=1 // loop_body
      %s19 = ssub.s32 %s14, 1
      %s20 = ssub.s32 %s14, 2
      %s27 = sadd.s32 1, %s22
      %p28 = scmp.ge.s32.totalorder %s27, 1
      %s29 = scalar_select %p28, 0, %s27
      %s30 = sadd.s32 1, %s21
      %s31 = scalar_select %p28, %s30, %s21
      %p32 = scmp.ge.s32.totalorder %s31, 2
      %s33 = scalar_select %p32, 0, %s31
      %s34 = ssub.s32 %s21, %s33
      %p35 = scmp.eq.s32.totalorder %s34, 0
      %s37 = sadd.s32 %s36, 1
      %s38 = scalar_select %p35, %s36, %s37
      %p41 = pneg %p35
      %p42 = scmp.eq.s32.totalorder %s14, 1
      %p43 = por %p41, %p42
      %p44 = scmp.ne.s32.totalorder %s36, %s39
      %p45 = scmp.eq.s32.totalorder %s14, 0
      %p46 = por %p44, %p45
      %p47 = scmp.ne.s32.totalorder %s36, %s39
      %p48 = scmp.eq.s32.totalorder %s19, 1
      %p49 = por %p47, %p48
      %p50 = scmp.ne.s32.totalorder %s39, %s40
      %p51 = scmp.eq.s32.totalorder %s19, 0
      %p52 = por %p50, %p51
      %p53 = scmp.ne.s32.totalorder %s39, %s40
      %p54 = scmp.eq.s32.totalorder %s20, 1
      %p55 = por %p53, %p54
      %p57 = scmp.ne.s32.totalorder %s40, %s56
      %p58 = scmp.eq.s32.totalorder %s20, 0
      %p59 = por %p57, %p58
      %s61 = sadd.s32 %s60, 1
      %p64 = scmp.eq.s32.totalorder %s14, 1
      %p65 = scmp.ne.s32.totalorder %s60, %s62
      %p66 = scmp.eq.s32.totalorder %s14, 0
      %p67 = por %p65, %p66
      %p68 = scmp.ne.s32.totalorder %s60, %s62
      %p69 = scmp.eq.s32.totalorder %s19, 1
      %p70 = por %p68, %p69
      %p71 = scmp.ne.s32.totalorder %s62, %s63
      %p72 = scmp.eq.s32.totalorder %s19, 0
      %p73 = por %p71, %p72
      %p74 = scmp.ne.s32.totalorder %s62, %s63
      %p75 = scmp.eq.s32.totalorder %s20, 1
      %p76 = por %p74, %p75
      %p78 = scmp.ne.s32.totalorder %s63, %s77
      %p79 = scmp.eq.s32.totalorder %s20, 0
      %p80 = por %p78, %p79
      %s82 = sadd.s32 %s81, 1
      %p85 = scmp.eq.s32.totalorder %s14, 1
      %p86 = scmp.ne.s32.totalorder %s81, %s83
      %p87 = scmp.eq.s32.totalorder %s14, 0
      %p88 = por %p86, %p87
      %p89 = scmp.ne.s32.totalorder %s81, %s83
      %p90 = scmp.eq.s32.totalorder %s19, 1
      %p91 = por %p89, %p90
      %p92 = scmp.ne.s32.totalorder %s83, %s84
      %p93 = scmp.eq.s32.totalorder %s19, 0
      %p94 = por %p92, %p93
      %p95 = scmp.ne.s32.totalorder %s83, %s84
      %p96 = scmp.eq.s32.totalorder %s20, 1
      %p97 = por %p95, %p96
      %p99 = scmp.ne.s32.totalorder %s84, %s98
      %p100 = scmp.eq.s32.totalorder %s20, 0
      %p101 = por %p99, %p100
      %s102 = ssub.s32 %s21, %s33
      %s103 = ssub.s32 %s22, %s29
      %s104 = sor.u32 %s102, %s103
      %p105 = scmp.eq.s32.totalorder %s104, 0
      %s107 = sadd.s32 %s106, 1
      %s108 = scalar_select %p105, %s106, %s107
      %p111 = pneg %p105
      %p112 = scmp.eq.s32.totalorder %s14, 1
      %p113 = por %p111, %p112
      %p114 = scmp.ne.s32.totalorder %s106, %s109
      %p115 = scmp.eq.s32.totalorder %s14, 0
      %p116 = por %p114, %p115
      %p117 = scmp.ne.s32.totalorder %s106, %s109
      %p118 = scmp.eq.s32.totalorder %s19, 1
      %p119 = por %p117, %p118
      %p120 = scmp.ne.s32.totalorder %s109, %s110
      %p121 = scmp.eq.s32.totalorder %s19, 0
      %p122 = por %p120, %p121
      %p123 = scmp.ne.s32.totalorder %s109, %s110
      %p124 = scmp.eq.s32.totalorder %s20, 1
      %p125 = por %p123, %p124
      %p127 = scmp.ne.s32.totalorder %s110, %s126
      %p128 = scmp.eq.s32.totalorder %s20, 0
      %p129 = por %p127, %p128
      %s130 = ssub.s32 %s21, %s33
      %s131 = ssub.s32 %s22, %s29
      %s132 = sor.u32 %s130, %s131
      %p133 = scmp.eq.s32.totalorder %s132, 0
      %s135 = sadd.s32 %s134, 1
      %s136 = scalar_select %p133, %s134, %s135
      %p139 = pneg %p133
      %p140 = scmp.eq.s32.totalorder %s14, 1
      %p141 = por %p139, %p140
      %p142 = scmp.ne.s32.totalorder %s134, %s137
      %p143 = scmp.eq.s32.totalorder %s14, 0
      %p144 = por %p142, %p143
      %p145 = scmp.ne.s32.totalorder %s134, %s137
      %p146 = scmp.eq.s32.totalorder %s19, 1
      %p147 = por %p145, %p146
      %p148 = scmp.ne.s32.totalorder %s137, %s138
      %p149 = scmp.eq.s32.totalorder %s19, 0
      %p150 = por %p148, %p149
      %p151 = scmp.ne.s32.totalorder %s137, %s138
      %p152 = scmp.eq.s32.totalorder %s20, 1
      %p153 = por %p151, %p152
      %p155 = scmp.ne.s32.totalorder %s138, %s154
      %p156 = scmp.eq.s32.totalorder %s20, 0
      %p157 = por %p155, %p156
      %p158 = scmp.le.s32.totalorder 1, %s14
      %p159 = scmp.lt.s32.totalorder %s14, 3
      %p160 = pnand %p158, %p159
      %p161 = pneg %p160
      // Predicated region
      $region9: #{pca_projector.1} parent=5 // pred_check
        _
      $region10: #{pca_projector.1} parent=5 // pred_check_branch
        %163 = sbr.rel (%p160) target = $region12
      $region11: #{pca_projector.1} parent=5 // pred_region
        %s164 = ssub.s32 %s14, 1
        // Predicated region
        $region13: #{pca_projector.1} parent=11 // pred_check
          %p165 = pneg %p73
        $region14: #{pca_projector.1} parent=11 // pred_check_branch
          %167 = sbr.rel (%p165) target = $region16
        $region15: #{pca_projector.1} parent=11 // pred_region
          _
        $region16: #{pca_projector.1} parent=11 // pred_fallthru
          _
        // Predicated region
        $region17: #{pca_projector.1} parent=11 // pred_check
          %p168 = pneg %p94
        $region18: #{pca_projector.1} parent=11 // pred_check_branch
          %170 = sbr.rel (%p168) target = $region20
        $region19: #{pca_projector.1} parent=11 // pred_region
          _
        $region20: #{pca_projector.1} parent=11 // pred_fallthru
          _
      $region12: #{pca_projector.1} parent=5 // pred_fallthru
        _
      %p171 = scmp.lt.s32.totalorder %s14, 2
      // Predicated region
      $region21: #{pca_projector.1} parent=5 // pred_check
        %p172 = pneg %p171
      $region22: #{pca_projector.1} parent=5 // pred_check_branch
        %174 = sbr.rel (%p172) target = $region24
      $region23: #{pca_projector.1} parent=5 // pred_region
        // Predicated region
        $region25: #{pca_projector.1} parent=23 // pred_check
          %p175 = pneg %p46
        $region26: #{pca_projector.1} parent=23 // pred_check_branch
          %177 = sbr.rel (%p175) target = $region28
        $region27: #{pca_projector.1} parent=23 // pred_region
          %p178 = scmp.lt.s32.totalorder %s21, 1
          %s179 = scalar_select %p178, %s21, 1
          %s180 = smul.addr %s179, 32
          %s181 = smul.addr %s180, 8
          %s182 = scalar_lea.vmem %s0, %s181
        $region28: #{pca_projector.1} parent=23 // pred_fallthru
          _
      $region24: #{pca_projector.1} parent=5 // pred_fallthru
        _
      %p183 = scmp.le.s32.totalorder 1, %s14
      %p184 = scmp.lt.s32.totalorder %s14, 3
      %p185 = pnand %p183, %p184
      %p186 = pneg %p185
      // Predicated region
      $region29: #{pca_projector.1} parent=5 // pred_check
        _
      $region30: #{pca_projector.1} parent=5 // pred_check_branch
        %188 = sbr.rel (%p185) target = $region32
      $region31: #{pca_projector.1} parent=5 // pred_region
        %s189 = ssub.s32 %s14, 1
        %p190 = scmp.lt.s32.totalorder %s23, 1
        %s191 = scalar_select %p190, %s23, 1
        %s192 = smul.addr %s191, 32
        %s193 = smul.addr %s192, 8
        %s194 = scalar_lea.vmem %s0, %s193
        %p195 = pneg %p52
        %p196 = pneg %p49
        %p197 = pneg %p73
        %p198 = pneg %p70
        %p199 = pneg %p94
        %p200 = pneg %p91
        %p201 = pneg %p122
        %p202 = pneg %p119
        %s203 = sand.u32 %s109, 1
        %s204 = scalar_lea.sflag [#allocation6], %s203
        %s205 = sand.u32 %s109, 1
        %s206 = smul.addr %s205, 512
        %s207 = scalar_lea.vmem [#allocation5], %s206
        %p208 = pneg %p150
        %p209 = pneg %p147
        %s210 = smul.u32 32, %s24
        %p211 = scmp.lt.s32.totalorder %s23, 1
        %s212 = scalar_select %p211, %s23, 1
        %p213 = scmp.lt.s32.totalorder %s210, 31
        %s214 = scalar_select %p213, %s210, 31
        %s215 = smul.addr %s212, 32
        %s216 = sadd.s32 %s214, %s215
        %s217 = smul.addr %s216, 8
        %s218 = scalar_lea.vmem %s4, %s217
        %p219 = scmp.lt.s32.totalorder %s23, 1
        %s220 = scalar_select %p219, %s23, 1
        %s221 = smul.addr %s220, 32
        %s222 = smul.addr %s221, 8
        %s223 = scalar_lea.vmem %s0, %s222
        %s224 = smul.u32 32, %s24
        %s225 = smul.u32 32, %s24
        %p226 = scmp.lt.s32.totalorder %s23, 1
        %s227 = scalar_select %p226, %s23, 1
        %p228 = scmp.lt.s32.totalorder %s225, 31
        %s229 = scalar_select %p228, %s225, 31
        %s230 = smul.addr %s227, 32
        %s231 = sadd.s32 %s229, %s230
        %s232 = smul.addr %s231, 8
        %s233 = scalar_lea.vmem %s4, %s232
        %s234 = smul.u32 32, %s24
        %p235 = scmp.eq.s32.totalorder %s24, 0
        // Predicated region
        $region33: #{pca_projector.1} parent=31 // pred_check
          %p236 = pneg %p235
        $region34: #{pca_projector.1} parent=31 // pred_check_branch
          %238 = sbr.rel (%p236) target = $region36
        $region35: #{pca_projector.1} parent=31 // pred_region
          %v239 = vld [vmem:[%s223] sm:$0xff]
          %v240 = vld [vmem:[%s223 + $0x8] sm:$0xff]
          %v241 = vld [vmem:[%s223 + $0x10] sm:$0xff]
          %v242 = vld [vmem:[%s223 + $0x18] sm:$0xff]
          %v243 = vld [vmem:[%s223 + $0x20] sm:$0xff]
          %v244 = vld [vmem:[%s223 + $0x28] sm:$0xff]
          %v245 = vld [vmem:[%s223 + $0x30] sm:$0xff]
          %v246 = vld [vmem:[%s223 + $0x38] sm:$0xff]
          %v247 = vld [vmem:[%s223 + $0x40] sm:$0xff]
          %v248 = vld [vmem:[%s223 + $0x48] sm:$0xff]
          %v249 = vld [vmem:[%s223 + $0x50] sm:$0xff]
          %v250 = vld [vmem:[%s223 + $0x58] sm:$0xff]
          %v251 = vld [vmem:[%s223 + $0x60] sm:$0xff]
          %v252 = vld [vmem:[%s223 + $0x68] sm:$0xff]
          %v253 = vld [vmem:[%s223 + $0x70] sm:$0xff]
          %v254 = vld [vmem:[%s223 + $0x78] sm:$0xff]
          %v255 = vld [vmem:[%s223 + $0x80] sm:$0xff]
          %v256 = vld [vmem:[%s223 + $0x88] sm:$0xff]
          %v257 = vld [vmem:[%s223 + $0x90] sm:$0xff]
          %v258 = vld [vmem:[%s223 + $0x98] sm:$0xff]
          %v259 = vld [vmem:[%s223 + $0xa0] sm:$0xff]
          %v260 = vld [vmem:[%s223 + $0xa8] sm:$0xff]
          %v261 = vld [vmem:[%s223 + $0xb0] sm:$0xff]
          %v262 = vld [vmem:[%s223 + $0xb8] sm:$0xff]
          %v263 = vld [vmem:[%s223 + $0xc0] sm:$0xff]
          %v264 = vld [vmem:[%s223 + $0xc8] sm:$0xff]
          %v265 = vld [vmem:[%s223 + $0xd0] sm:$0xff]
          %v266 = vld [vmem:[%s223 + $0xd8] sm:$0xff]
          %v267 = vld [vmem:[%s223 + $0xe0] sm:$0xff]
          %v268 = vld [vmem:[%s223 + $0xe8] sm:$0xff]
          %v269 = vld [vmem:[%s223 + $0xf0] sm:$0xff]
          %v270 = vld [vmem:[%s223 + $0xf8] sm:$0xff]
          %v271 = vld [vmem:[%s1] sm:$0xff]
          %v272 = vld [vmem:[%s1 + $0x8] sm:$0xff]
          %v273 = vld [vmem:[%s1 + $0x10] sm:$0xff]
          %v274 = vld [vmem:[%s1 + $0x18] sm:$0xff]
          %v275 = vld [vmem:[%s1 + $0x20] sm:$0xff]
          %v276 = vld [vmem:[%s1 + $0x28] sm:$0xff]
          %v277 = vld [vmem:[%s1 + $0x30] sm:$0xff]
          %v278 = vld [vmem:[%s1 + $0x38] sm:$0xff]
          %v279 = vld [vmem:[%s1 + $0x40] sm:$0xff]
          %v280 = vld [vmem:[%s1 + $0x48] sm:$0xff]
          %v281 = vld [vmem:[%s1 + $0x50] sm:$0xff]
          %v282 = vld [vmem:[%s1 + $0x58] sm:$0xff]
          %v283 = vld [vmem:[%s1 + $0x60] sm:$0xf]
          %v284 = vld [vmem:[%s1 + $0x68] sm:$0xf]
          %v285 = vld [vmem:[%s1 + $0x70] sm:$0xf]
          %v286 = vld [vmem:[%s2] sm:$0x7]
          %v288 = vlaneseq
          %v289 = vshrl.u32 %v288, 7
          %v290 = vsub.s32 0, %v289
          %v291 = vrot.slane %v286, %v290
          %v292 = vlaneseq
          %v293 = vshrl.u32 %v292, 7
          %v294 = vsub.s32 1, %v293
          %v295 = vrot.slane %v286, %v294
          %v296 = vlaneseq
          %v297 = vshrl.u32 %v296, 7
          %v298 = vsub.s32 2, %v297
          %v299 = vrot.slane %v286, %v298
          %vm303 = vcmask 293888
          %v305 = vsel %vm303, %v239, 0
          %v308 = vsel %vm303, %v240, 0
          %v311 = vsel %vm303, %v241, 0
          %v314 = vsel %vm303, %v242, 0
          %v317 = vsel %vm303, %v243, 0
          %v320 = vsel %vm303, %v244, 0
          %v323 = vsel %vm303, %v245, 0
          %v326 = vsel %vm303, %v246, 0
          %v329 = vsel %vm303, %v247, 0
          %v332 = vsel %vm303, %v248, 0
          %v335 = vsel %vm303, %v249, 0
          %v338 = vsel %vm303, %v250, 0
          %v341 = vsel %vm303, %v251, 0
          %v344 = vsel %vm303, %v252, 0
          %v347 = vsel %vm303, %v253, 0
          %v350 = vsel %vm303, %v254, 0
          %v353 = vsel %vm303, %v255, 0
          %v356 = vsel %vm303, %v256, 0
          %v359 = vsel %vm303, %v257, 0
          %v362 = vsel %vm303, %v258, 0
          %v365 = vsel %vm303, %v259, 0
          %v368 = vsel %vm303, %v260, 0
          %v371 = vsel %vm303, %v261, 0
          %v374 = vsel %vm303, %v262, 0
          %v377 = vsel %vm303, %v263, 0
          %v380 = vsel %vm303, %v264, 0
          %v383 = vsel %vm303, %v265, 0
          %v386 = vsel %vm303, %v266, 0
          %v389 = vsel %vm303, %v267, 0
          %v392 = vsel %vm303, %v268, 0
          %v395 = vsel %vm303, %v269, 0
          %v398 = vsel %vm303, %v270, 0
          %vm400 = vcmask 1043456
          %v402 = vsel %vm400, %v283, 0
          %v405 = vsel %vm400, %v284, 0
          %v408 = vsel %vm400, %v285, 0
          %410 = vmatprep.subr.mxu0 0.0
          %411 = vmatpush1.msra.mxu0 0.0
          %412 = vmatprep.subr.mxu0 0.0
          %413 = vmatpush1.msra.mxu0 0.0
          %414 = vmatprep.subr.mxu0 0.0
          %415 = vmatpush1.msra.mxu0 0.0
          %416 = vmatprep.subr.mxu0 0.0
          %417 = vmatpush1.msra.mxu0 0.0
          %418 = vmatprep.subr.mxu0 0.0
          %419 = vmatpush1.msra.mxu0 0.0
          %420 = vmatprep.subr.mxu0 0.0
          %421 = vmatpush1.msra.mxu0 0.0
          %422 = vmatprep.subr.mxu0 0.0
          %423 = vmatpush1.msra.mxu0 0.0
          %424 = vmatprep.subr.mxu0 0.0
          %425 = vmatpush1.msra.mxu0 0.0
          %426 = vmatprep.subr.mxu0 0.0
          %427 = vmatpush1.msra.mxu0 0.0
          %428 = vmatprep.subr.mxu0 0.0
          %429 = vmatpush1.msra.mxu0 0.0
          %430 = vmatprep.subr.mxu0 0.0
          %431 = vmatpush1.msra.mxu0 0.0
          %432 = vmatprep.subr.mxu0 %v405
          %433 = vmatpush1.msra.mxu0 %v402
          %434 = vmatprep.subr.mxu0 %v281
          %435 = vmatpush1.msra.mxu0 %v280
          %436 = vmatprep.subr.mxu0 %v278
          %437 = vmatpush1.msra.mxu0 %v277
          %438 = vmatprep.subr.mxu0 %v275
          %439 = vmatpush1.msra.mxu0 %v274
          %440 = vmatprep.subr.mxu0 %v272
          %441 = vmatpush1.msra.mxu0 %v271
          %442 = vmatprep.subr.mxu0 0.0
          %443 = vmatpush2.msra.mxu0 0.0
          %444 = vmatprep.subr.mxu0 0.0
          %445 = vmatpush2.msra.mxu0 0.0
          %446 = vmatprep.subr.mxu0 0.0
          %447 = vmatpush2.msra.mxu0 0.0
          %448 = vmatprep.subr.mxu0 0.0
          %449 = vmatpush2.msra.mxu0 0.0
          %450 = vmatprep.subr.mxu0 0.0
          %451 = vmatpush2.msra.mxu0 0.0
          %452 = vmatprep.subr.mxu0 0.0
          %453 = vmatpush2.msra.mxu0 0.0
          %454 = vmatprep.subr.mxu0 0.0
          %455 = vmatpush2.msra.mxu0 0.0
          %456 = vmatprep.subr.mxu0 0.0
          %457 = vmatpush2.msra.mxu0 0.0
          %458 = vmatprep.subr.mxu0 0.0
          %459 = vmatpush2.msra.mxu0 0.0
          %460 = vmatprep.subr.mxu0 0.0
          %461 = vmatpush2.msra.mxu0 0.0
          %462 = vmatprep.subr.mxu0 0.0
          %463 = vmatpush2.msra.mxu0 0.0
          %464 = vmatprep.subr.mxu0 0.0
          %465 = vmatpush2.msra.mxu0 0.0
          %466 = vmatprep.subr.mxu0 0.0
          %467 = vmatpush2.msra.mxu0 0.0
          %468 = vmatprep.subr.mxu0 0.0
          %469 = vmatpush2.msra.mxu0 0.0
          %470 = vmatprep.subr.mxu0 0.0
          %471 = vmatpush2.msra.mxu0 0.0
          %472 = vmatprep.subr.mxu0 0.0
          %473 = vmatpush2.msra.mxu0 0.0
          %474 = vmatprep.mubr.f32.mxu0 0.0
          %475 = vmatmul.mubr.f32.gmra.mxu0 %v305
          %v476 = vpop.f32.mrf.mxu0
          %v477 = vadd.f32 %v291, %v476
          %v478 = vpop.f32.mrf.mxu0
          %v479 = vadd.f32 %v295, %v478
          %480 = vmatprep.mubr.f32.mxu0 0.0
          %481 = vmatmul.mubr.f32.gmra.mxu0 %v308
          %v482 = vpop.f32.mrf.mxu0
          %v483 = vadd.f32 %v291, %v482
          %v484 = vpop.f32.mrf.mxu0
          %v485 = vadd.f32 %v295, %v484
          %486 = vmatprep.mubr.f32.mxu0 0.0
          %487 = vmatmul.mubr.f32.gmra.mxu0 %v311
          %v488 = vpop.f32.mrf.mxu0
          %v489 = vadd.f32 %v291, %v488
          %v490 = vpop.f32.mrf.mxu0
          %v491 = vadd.f32 %v295, %v490
          %492 = vmatprep.mubr.f32.mxu0 0.0
          %493 = vmatmul.mubr.f32.gmra.mxu0 %v314
          %v494 = vpop.f32.mrf.mxu0
          %v495 = vadd.f32 %v291, %v494
          %v496 = vpop.f32.mrf.mxu0
          %v497 = vadd.f32 %v295, %v496
          %498 = vmatprep.mubr.f32.mxu0 0.0
          %499 = vmatmul.mubr.f32.gmra.mxu0 %v317
          %v500 = vpop.f32.mrf.mxu0
          %v501 = vadd.f32 %v291, %v500
          %v502 = vpop.f32.mrf.mxu0
          %v503 = vadd.f32 %v295, %v502
          %504 = vmatprep.mubr.f32.mxu0 0.0
          %505 = vmatmul.mubr.f32.gmra.mxu0 %v320
          %v506 = vpop.f32.mrf.mxu0
          %v507 = vadd.f32 %v291, %v506
          %v508 = vpop.f32.mrf.mxu0
          %v509 = vadd.f32 %v295, %v508
          %510 = vmatprep.mubr.f32.mxu0 0.0
          %511 = vmatmul.mubr.f32.gmra.mxu0 %v323
          %v512 = vpop.f32.mrf.mxu0
          %v513 = vadd.f32 %v291, %v512
          %v514 = vpop.f32.mrf.mxu0
          %v515 = vadd.f32 %v295, %v514
          %516 = vmatprep.mubr.f32.mxu0 0.0
          %517 = vmatmul.mubr.f32.gmra.mxu0 %v326
          %v518 = vpop.f32.mrf.mxu0
          %v519 = vadd.f32 %v291, %v518
          %v520 = vpop.f32.mrf.mxu0
          %v521 = vadd.f32 %v295, %v520
          %522 = vmatprep.mubr.f32.mxu0 0.0
          %523 = vmatmul.mubr.f32.gmra.mxu0 %v329
          %v524 = vpop.f32.mrf.mxu0
          %v525 = vadd.f32 %v291, %v524
          %v526 = vpop.f32.mrf.mxu0
          %v527 = vadd.f32 %v295, %v526
          %528 = vmatprep.mubr.f32.mxu0 0.0
          %529 = vmatmul.mubr.f32.gmra.mxu0 %v332
          %v530 = vpop.f32.mrf.mxu0
          %v531 = vadd.f32 %v291, %v530
          %v532 = vpop.f32.mrf.mxu0
          %v533 = vadd.f32 %v295, %v532
          %534 = vmatprep.mubr.f32.mxu0 0.0
          %535 = vmatmul.mubr.f32.gmra.mxu0 %v335
          %v536 = vpop.f32.mrf.mxu0
          %v537 = vadd.f32 %v291, %v536
          %v538 = vpop.f32.mrf.mxu0
          %v539 = vadd.f32 %v295, %v538
          %540 = vmatprep.mubr.f32.mxu0 0.0
          %541 = vmatmul.mubr.f32.gmra.mxu0 %v338
          %v542 = vpop.f32.mrf.mxu0
          %v543 = vadd.f32 %v291, %v542
          %v544 = vpop.f32.mrf.mxu0
          %v545 = vadd.f32 %v295, %v544
          %546 = vmatprep.mubr.f32.mxu0 0.0
          %547 = vmatmul.mubr.f32.gmra.mxu0 %v341
          %v548 = vpop.f32.mrf.mxu0
          %v549 = vadd.f32 %v291, %v548
          %v550 = vpop.f32.mrf.mxu0
          %v551 = vadd.f32 %v295, %v550
          %552 = vmatprep.mubr.f32.mxu0 0.0
          %553 = vmatmul.mubr.f32.gmra.mxu0 %v344
          %v554 = vpop.f32.mrf.mxu0
          %v555 = vadd.f32 %v291, %v554
          %v556 = vpop.f32.mrf.mxu0
          %v557 = vadd.f32 %v295, %v556
          %558 = vmatprep.mubr.f32.mxu0 0.0
          %559 = vmatmul.mubr.f32.gmra.mxu0 %v347
          %v560 = vpop.f32.mrf.mxu0
          %v561 = vadd.f32 %v291, %v560
          %v562 = vpop.f32.mrf.mxu0
          %v563 = vadd.f32 %v295, %v562
          %564 = vmatprep.mubr.f32.mxu0 0.0
          %565 = vmatmul.mubr.f32.gmra.mxu0 %v350
          %v566 = vpop.f32.mrf.mxu0
          %v567 = vadd.f32 %v291, %v566
          %v568 = vpop.f32.mrf.mxu0
          %v569 = vadd.f32 %v295, %v568
          %570 = vmatprep.mubr.f32.mxu0 0.0
          %571 = vmatmul.mubr.f32.gmra.mxu0 %v353
          %v572 = vpop.f32.mrf.mxu0
          %v573 = vadd.f32 %v291, %v572
          %v574 = vpop.f32.mrf.mxu0
          %v575 = vadd.f32 %v295, %v574
          %576 = vmatprep.mubr.f32.mxu0 0.0
          %577 = vmatmul.mubr.f32.gmra.mxu0 %v356
          %v578 = vpop.f32.mrf.mxu0
          %v579 = vadd.f32 %v291, %v578
          %v580 = vpop.f32.mrf.mxu0
          %v581 = vadd.f32 %v295, %v580
          %582 = vmatprep.mubr.f32.mxu0 0.0
          %583 = vmatmul.mubr.f32.gmra.mxu0 %v359
          %v584 = vpop.f32.mrf.mxu0
          %v585 = vadd.f32 %v291, %v584
          %v586 = vpop.f32.mrf.mxu0
          %v587 = vadd.f32 %v295, %v586
          %588 = vmatprep.mubr.f32.mxu0 0.0
          %589 = vmatmul.mubr.f32.gmra.mxu0 %v362
          %v590 = vpop.f32.mrf.mxu0
          %v591 = vadd.f32 %v291, %v590
          %v592 = vpop.f32.mrf.mxu0
          %v593 = vadd.f32 %v295, %v592
          %594 = vmatprep.mubr.f32.mxu0 0.0
          %595 = vmatmul.mubr.f32.gmra.mxu0 %v365
          %v596 = vpop.f32.mrf.mxu0
          %v597 = vadd.f32 %v291, %v596
          %v598 = vpop.f32.mrf.mxu0
          %v599 = vadd.f32 %v295, %v598
          %600 = vmatprep.mubr.f32.mxu0 0.0
          %601 = vmatmul.mubr.f32.gmra.mxu0 %v368
          %v602 = vpop.f32.mrf.mxu0
          %v603 = vadd.f32 %v291, %v602
          %v604 = vpop.f32.mrf.mxu0
          %v605 = vadd.f32 %v295, %v604
          %606 = vmatprep.mubr.f32.mxu0 0.0
          %607 = vmatmul.mubr.f32.gmra.mxu0 %v371
          %v608 = vpop.f32.mrf.mxu0
          %v609 = vadd.f32 %v291, %v608
          %v610 = vpop.f32.mrf.mxu0
          %v611 = vadd.f32 %v295, %v610
          %612 = vmatprep.mubr.f32.mxu0 0.0
          %613 = vmatmul.mubr.f32.gmra.mxu0 %v374
          %v614 = vpop.f32.mrf.mxu0
          %v615 = vadd.f32 %v291, %v614
          %v616 = vpop.f32.mrf.mxu0
          %v617 = vadd.f32 %v295, %v616
          %618 = vmatprep.mubr.f32.mxu0 0.0
          %619 = vmatmul.mubr.f32.gmra.mxu0 %v377
          %v620 = vpop.f32.mrf.mxu0
          %v621 = vadd.f32 %v291, %v620
          %v622 = vpop.f32.mrf.mxu0
          %v623 = vadd.f32 %v295, %v622
          %624 = vmatprep.mubr.f32.mxu0 0.0
          %625 = vmatmul.mubr.f32.gmra.mxu0 %v380
          %v626 = vpop.f32.mrf.mxu0
          %v627 = vadd.f32 %v291, %v626
          %v628 = vpop.f32.mrf.mxu0
          %v629 = vadd.f32 %v295, %v628
          %630 = vmatprep.mubr.f32.mxu0 0.0
          %631 = vmatmul.mubr.f32.gmra.mxu0 %v383
          %v632 = vpop.f32.mrf.mxu0
          %v633 = vadd.f32 %v291, %v632
          %v634 = vpop.f32.mrf.mxu0
          %v635 = vadd.f32 %v295, %v634
          %636 = vmatprep.mubr.f32.mxu0 0.0
          %637 = vmatmul.mubr.f32.gmra.mxu0 %v386
          %v638 = vpop.f32.mrf.mxu0
          %v639 = vadd.f32 %v291, %v638
          %v640 = vpop.f32.mrf.mxu0
          %v641 = vadd.f32 %v295, %v640
          %642 = vmatprep.mubr.f32.mxu0 0.0
          %643 = vmatmul.mubr.f32.gmra.mxu0 %v389
          %v644 = vpop.f32.mrf.mxu0
          %v645 = vadd.f32 %v291, %v644
          %v646 = vpop.f32.mrf.mxu0
          %v647 = vadd.f32 %v295, %v646
          %648 = vmatprep.mubr.f32.mxu0 0.0
          %649 = vmatmul.mubr.f32.gmra.mxu0 %v392
          %v650 = vpop.f32.mrf.mxu0
          %v651 = vadd.f32 %v291, %v650
          %v652 = vpop.f32.mrf.mxu0
          %v653 = vadd.f32 %v295, %v652
          %654 = vmatprep.mubr.f32.mxu0 0.0
          %655 = vmatmul.mubr.f32.gmra.mxu0 %v395
          %v656 = vpop.f32.mrf.mxu0
          %v657 = vadd.f32 %v291, %v656
          %v658 = vpop.f32.mrf.mxu0
          %v659 = vadd.f32 %v295, %v658
          %660 = vmatprep.mubr.f32.mxu0 0.0
          %661 = vmatmul.mubr.f32.gmra.mxu0 %v398
          %v662 = vpop.f32.mrf.mxu0
          %v663 = vadd.f32 %v291, %v662
          %v664 = vpop.f32.mrf.mxu0
          %v665 = vadd.f32 %v295, %v664
          %666 = vdwg.mxu0
          %667 = vmatprep.subr.mxu0 0.0
          %668 = vmatpush1.msra.mxu0 0.0
          %669 = vmatprep.subr.mxu0 0.0
          %670 = vmatpush1.msra.mxu0 0.0
          %671 = vmatprep.subr.mxu0 0.0
          %672 = vmatpush1.msra.mxu0 0.0
          %673 = vmatprep.subr.mxu0 0.0
          %674 = vmatpush1.msra.mxu0 0.0
          %675 = vmatprep.subr.mxu0 0.0
          %676 = vmatpush1.msra.mxu0 0.0
          %677 = vmatprep.subr.mxu0 0.0
          %678 = vmatpush1.msra.mxu0 0.0
          %679 = vmatprep.subr.mxu0 0.0
          %680 = vmatpush1.msra.mxu0 0.0
          %681 = vmatprep.subr.mxu0 0.0
          %682 = vmatpush1.msra.mxu0 0.0
          %683 = vmatprep.subr.mxu0 0.0
          %684 = vmatpush1.msra.mxu0 0.0
          %685 = vmatprep.subr.mxu0 0.0
          %686 = vmatpush1.msra.mxu0 0.0
          %687 = vmatprep.subr.mxu0 0.0
          %688 = vmatpush1.msra.mxu0 0.0
          %689 = vmatprep.subr.mxu0 0.0
          %690 = vmatpush1.msra.mxu0 %v408
          %691 = vmatprep.subr.mxu0 0.0
          %692 = vmatpush1.msra.mxu0 %v282
          %693 = vmatprep.subr.mxu0 0.0
          %694 = vmatpush1.msra.mxu0 %v279
          %695 = vmatprep.subr.mxu0 0.0
          %696 = vmatpush1.msra.mxu0 %v276
          %697 = vmatprep.subr.mxu0 0.0
          %698 = vmatpush1.msra.mxu0 %v273
          %699 = vmatprep.subr.mxu0 0.0
          %700 = vmatpush2.msra.mxu0 0.0
          %701 = vmatprep.subr.mxu0 0.0
          %702 = vmatpush2.msra.mxu0 0.0
          %703 = vmatprep.subr.mxu0 0.0
          %704 = vmatpush2.msra.mxu0 0.0
          %705 = vmatprep.subr.mxu0 0.0
          %706 = vmatpush2.msra.mxu0 0.0
          %707 = vmatprep.subr.mxu0 0.0
          %708 = vmatpush2.msra.mxu0 0.0
          %709 = vmatprep.subr.mxu0 0.0
          %710 = vmatpush2.msra.mxu0 0.0
          %711 = vmatprep.subr.mxu0 0.0
          %712 = vmatpush2.msra.mxu0 0.0
          %713 = vmatprep.subr.mxu0 0.0
          %714 = vmatpush2.msra.mxu0 0.0
          %715 = vmatprep.subr.mxu0 0.0
          %716 = vmatpush2.msra.mxu0 0.0
          %717 = vmatprep.subr.mxu0 0.0
          %718 = vmatpush2.msra.mxu0 0.0
          %719 = vmatprep.subr.mxu0 0.0
          %720 = vmatpush2.msra.mxu0 0.0
          %721 = vmatprep.subr.mxu0 0.0
          %722 = vmatpush2.msra.mxu0 0.0
          %723 = vmatprep.subr.mxu0 0.0
          %724 = vmatpush2.msra.mxu0 0.0
          %725 = vmatprep.subr.mxu0 0.0
          %726 = vmatpush2.msra.mxu0 0.0
          %727 = vmatprep.subr.mxu0 0.0
          %728 = vmatpush2.msra.mxu0 0.0
          %729 = vmatprep.subr.mxu0 0.0
          %730 = vmatpush2.msra.mxu0 0.0
          %731 = vmatprep.mubr.f32.mxu0 0.0
          %732 = vmatmul.mubr.f32.gmra.mxu0 %v305
          %v733 = vpop.f32.mrf.mxu0
          %v734 = vadd.f32 %v299, %v733
          %v735 = vpop.f32.mrf.mxu0
          %736 = vmatprep.mubr.f32.mxu0 0.0
          %737 = vmatmul.mubr.f32.gmra.mxu0 %v308
          %v738 = vpop.f32.mrf.mxu0
          %v739 = vadd.f32 %v299, %v738
          %v740 = vpop.f32.mrf.mxu0
          %741 = vmatprep.mubr.f32.mxu0 0.0
          %742 = vmatmul.mubr.f32.gmra.mxu0 %v311
          %v743 = vpop.f32.mrf.mxu0
          %v744 = vadd.f32 %v299, %v743
          %v745 = vpop.f32.mrf.mxu0
          %746 = vmatprep.mubr.f32.mxu0 0.0
          %747 = vmatmul.mubr.f32.gmra.mxu0 %v314
          %v748 = vpop.f32.mrf.mxu0
          %v749 = vadd.f32 %v299, %v748
          %v750 = vpop.f32.mrf.mxu0
          %751 = vmatprep.mubr.f32.mxu0 0.0
          %752 = vmatmul.mubr.f32.gmra.mxu0 %v317
          %v753 = vpop.f32.mrf.mxu0
          %v754 = vadd.f32 %v299, %v753
          %v755 = vpop.f32.mrf.mxu0
          %756 = vmatprep.mubr.f32.mxu0 0.0
          %757 = vmatmul.mubr.f32.gmra.mxu0 %v320
          %v758 = vpop.f32.mrf.mxu0
          %v759 = vadd.f32 %v299, %v758
          %v760 = vpop.f32.mrf.mxu0
          %761 = vmatprep.mubr.f32.mxu0 0.0
          %762 = vmatmul.mubr.f32.gmra.mxu0 %v323
          %v763 = vpop.f32.mrf.mxu0
          %v764 = vadd.f32 %v299, %v763
          %v765 = vpop.f32.mrf.mxu0
          %766 = vmatprep.mubr.f32.mxu0 0.0
          %767 = vmatmul.mubr.f32.gmra.mxu0 %v326
          %v768 = vpop.f32.mrf.mxu0
          %v769 = vadd.f32 %v299, %v768
          %v770 = vpop.f32.mrf.mxu0
          %771 = vmatprep.mubr.f32.mxu0 0.0
          %772 = vmatmul.mubr.f32.gmra.mxu0 %v329
          %v773 = vpop.f32.mrf.mxu0
          %v774 = vadd.f32 %v299, %v773
          %v775 = vpop.f32.mrf.mxu0
          %776 = vmatprep.mubr.f32.mxu0 0.0
          %777 = vmatmul.mubr.f32.gmra.mxu0 %v332
          %v778 = vpop.f32.mrf.mxu0
          %v779 = vadd.f32 %v299, %v778
          %v780 = vpop.f32.mrf.mxu0
          %781 = vmatprep.mubr.f32.mxu0 0.0
          %782 = vmatmul.mubr.f32.gmra.mxu0 %v335
          %v783 = vpop.f32.mrf.mxu0
          %v784 = vadd.f32 %v299, %v783
          %v785 = vpop.f32.mrf.mxu0
          %786 = vmatprep.mubr.f32.mxu0 0.0
          %787 = vmatmul.mubr.f32.gmra.mxu0 %v338
          %v788 = vpop.f32.mrf.mxu0
          %v789 = vadd.f32 %v299, %v788
          %v790 = vpop.f32.mrf.mxu0
          %791 = vmatprep.mubr.f32.mxu0 0.0
          %792 = vmatmul.mubr.f32.gmra.mxu0 %v341
          %v793 = vpop.f32.mrf.mxu0
          %v794 = vadd.f32 %v299, %v793
          %v795 = vpop.f32.mrf.mxu0
          %796 = vmatprep.mubr.f32.mxu0 0.0
          %797 = vmatmul.mubr.f32.gmra.mxu0 %v344
          %v798 = vpop.f32.mrf.mxu0
          %v799 = vadd.f32 %v299, %v798
          %v800 = vpop.f32.mrf.mxu0
          %801 = vmatprep.mubr.f32.mxu0 0.0
          %802 = vmatmul.mubr.f32.gmra.mxu0 %v347
          %v803 = vpop.f32.mrf.mxu0
          %v804 = vadd.f32 %v299, %v803
          %v805 = vpop.f32.mrf.mxu0
          %806 = vmatprep.mubr.f32.mxu0 0.0
          %807 = vmatmul.mubr.f32.gmra.mxu0 %v350
          %v808 = vpop.f32.mrf.mxu0
          %v809 = vadd.f32 %v299, %v808
          %v810 = vpop.f32.mrf.mxu0
          %811 = vmatprep.mubr.f32.mxu0 0.0
          %812 = vmatmul.mubr.f32.gmra.mxu0 %v353
          %v813 = vpop.f32.mrf.mxu0
          %v814 = vadd.f32 %v299, %v813
          %v815 = vpop.f32.mrf.mxu0
          %816 = vmatprep.mubr.f32.mxu0 0.0
          %817 = vmatmul.mubr.f32.gmra.mxu0 %v356
          %v818 = vpop.f32.mrf.mxu0
          %v819 = vadd.f32 %v299, %v818
          %v820 = vpop.f32.mrf.mxu0
          %821 = vmatprep.mubr.f32.mxu0 0.0
          %822 = vmatmul.mubr.f32.gmra.mxu0 %v359
          %v823 = vpop.f32.mrf.mxu0
          %v824 = vadd.f32 %v299, %v823
          %v825 = vpop.f32.mrf.mxu0
          %826 = vmatprep.mubr.f32.mxu0 0.0
          %827 = vmatmul.mubr.f32.gmra.mxu0 %v362
          %v828 = vpop.f32.mrf.mxu0
          %v829 = vadd.f32 %v299, %v828
          %v830 = vpop.f32.mrf.mxu0
          %831 = vmatprep.mubr.f32.mxu0 0.0
          %832 = vmatmul.mubr.f32.gmra.mxu0 %v365
          %v833 = vpop.f32.mrf.mxu0
          %v834 = vadd.f32 %v299, %v833
          %v835 = vpop.f32.mrf.mxu0
          %836 = vmatprep.mubr.f32.mxu0 0.0
          %837 = vmatmul.mubr.f32.gmra.mxu0 %v368
          %v838 = vpop.f32.mrf.mxu0
          %v839 = vadd.f32 %v299, %v838
          %v840 = vpop.f32.mrf.mxu0
          %841 = vmatprep.mubr.f32.mxu0 0.0
          %842 = vmatmul.mubr.f32.gmra.mxu0 %v371
          %v843 = vpop.f32.mrf.mxu0
          %v844 = vadd.f32 %v299, %v843
          %v845 = vpop.f32.mrf.mxu0
          %846 = vmatprep.mubr.f32.mxu0 0.0
          %847 = vmatmul.mubr.f32.gmra.mxu0 %v374
          %v848 = vpop.f32.mrf.mxu0
          %v849 = vadd.f32 %v299, %v848
          %v850 = vpop.f32.mrf.mxu0
          %851 = vmatprep.mubr.f32.mxu0 0.0
          %852 = vmatmul.mubr.f32.gmra.mxu0 %v377
          %v853 = vpop.f32.mrf.mxu0
          %v854 = vadd.f32 %v299, %v853
          %v855 = vpop.f32.mrf.mxu0
          %856 = vmatprep.mubr.f32.mxu0 0.0
          %857 = vmatmul.mubr.f32.gmra.mxu0 %v380
          %v858 = vpop.f32.mrf.mxu0
          %v859 = vadd.f32 %v299, %v858
          %v860 = vpop.f32.mrf.mxu0
          %861 = vmatprep.mubr.f32.mxu0 0.0
          %862 = vmatmul.mubr.f32.gmra.mxu0 %v383
          %v863 = vpop.f32.mrf.mxu0
          %v864 = vadd.f32 %v299, %v863
          %v865 = vpop.f32.mrf.mxu0
          %866 = vmatprep.mubr.f32.mxu0 0.0
          %867 = vmatmul.mubr.f32.gmra.mxu0 %v386
          %v868 = vpop.f32.mrf.mxu0
          %v869 = vadd.f32 %v299, %v868
          %v870 = vpop.f32.mrf.mxu0
          %871 = vmatprep.mubr.f32.mxu0 0.0
          %872 = vmatmul.mubr.f32.gmra.mxu0 %v389
          %v873 = vpop.f32.mrf.mxu0
          %v874 = vadd.f32 %v299, %v873
          %v875 = vpop.f32.mrf.mxu0
          %876 = vmatprep.mubr.f32.mxu0 0.0
          %877 = vmatmul.mubr.f32.gmra.mxu0 %v392
          %v878 = vpop.f32.mrf.mxu0
          %v879 = vadd.f32 %v299, %v878
          %v880 = vpop.f32.mrf.mxu0
          %881 = vmatprep.mubr.f32.mxu0 0.0
          %882 = vmatmul.mubr.f32.gmra.mxu0 %v395
          %v883 = vpop.f32.mrf.mxu0
          %v884 = vadd.f32 %v299, %v883
          %v885 = vpop.f32.mrf.mxu0
          %886 = vmatprep.mubr.f32.mxu0 0.0
          %887 = vmatmul.mubr.f32.gmra.mxu0 %v398
          %v888 = vpop.f32.mrf.mxu0
          %v889 = vadd.f32 %v299, %v888
          %v890 = vpop.f32.mrf.mxu0
          %891 = vdwg.mxu0
          %892 = vst [vmem:[#allocation2] sm:$0xff] %v477
          %893 = vst [vmem:[#allocation2 + $0x8] sm:$0xff] %v483
          %894 = vst [vmem:[#allocation2 + $0x10] sm:$0xff] %v489
          %895 = vst [vmem:[#allocation2 + $0x18] sm:$0xff] %v495
          %896 = vst [vmem:[#allocation2 + $0x20] sm:$0xff] %v501
          %897 = vst [vmem:[#allocation2 + $0x28] sm:$0xff] %v507
          %898 = vst [vmem:[#allocation2 + $0x30] sm:$0xff] %v513
          %899 = vst [vmem:[#allocation2 + $0x38] sm:$0xff] %v519
          %900 = vst [vmem:[#allocation2 + $0x40] sm:$0xff] %v525
          %901 = vst [vmem:[#allocation2 + $0x48] sm:$0xff] %v531
          %902 = vst [vmem:[#allocation2 + $0x50] sm:$0xff] %v537
          %903 = vst [vmem:[#allocation2 + $0x58] sm:$0xff] %v543
          %904 = vst [vmem:[#allocation2 + $0x60] sm:$0xff] %v549
          %905 = vst [vmem:[#allocation2 + $0x68] sm:$0xff] %v555
          %906 = vst [vmem:[#allocation2 + $0x70] sm:$0xff] %v561
          %907 = vst [vmem:[#allocation2 + $0x78] sm:$0xff] %v567
          %908 = vst [vmem:[#allocation2 + $0x80] sm:$0xff] %v573
          %909 = vst [vmem:[#allocation2 + $0x88] sm:$0xff] %v579
          %910 = vst [vmem:[#allocation2 + $0x90] sm:$0xff] %v585
          %911 = vst [vmem:[#allocation2 + $0x98] sm:$0xff] %v591
          %912 = vst [vmem:[#allocation2 + $0xa0] sm:$0xff] %v597
          %913 = vst [vmem:[#allocation2 + $0xa8] sm:$0xff] %v603
          %914 = vst [vmem:[#allocation2 + $0xb0] sm:$0xff] %v609
          %915 = vst [vmem:[#allocation2 + $0xb8] sm:$0xff] %v615
          %916 = vst [vmem:[#allocation2 + $0xc0] sm:$0xff] %v621
          %917 = vst [vmem:[#allocation2 + $0xc8] sm:$0xff] %v627
          %918 = vst [vmem:[#allocation2 + $0xd0] sm:$0xff] %v633
          %919 = vst [vmem:[#allocation2 + $0xd8] sm:$0xff] %v639
          %920 = vst [vmem:[#allocation2 + $0xe0] sm:$0xff] %v645
          %921 = vst [vmem:[#allocation2 + $0xe8] sm:$0xff] %v651
          %922 = vst [vmem:[#allocation2 + $0xf0] sm:$0xff] %v657
          %923 = vst [vmem:[#allocation2 + $0xf8] sm:$0xff] %v663
          %924 = vst [vmem:[#allocation3] sm:$0xff] %v479
          %925 = vst [vmem:[#allocation3 + $0x8] sm:$0xff] %v485
          %926 = vst [vmem:[#allocation3 + $0x10] sm:$0xff] %v491
          %927 = vst [vmem:[#allocation3 + $0x18] sm:$0xff] %v497
          %928 = vst [vmem:[#allocation3 + $0x20] sm:$0xff] %v503
          %929 = vst [vmem:[#allocation3 + $0x28] sm:$0xff] %v509
          %930 = vst [vmem:[#allocation3 + $0x30] sm:$0xff] %v515
          %931 = vst [vmem:[#allocation3 + $0x38] sm:$0xff] %v521
          %932 = vst [vmem:[#allocation3 + $0x40] sm:$0xff] %v527
          %933 = vst [vmem:[#allocation3 + $0x48] sm:$0xff] %v533
          %934 = vst [vmem:[#allocation3 + $0x50] sm:$0xff] %v539
          %935 = vst [vmem:[#allocation3 + $0x58] sm:$0xff] %v545
          %936 = vst [vmem:[#allocation3 + $0x60] sm:$0xff] %v551
          %937 = vst [vmem:[#allocation3 + $0x68] sm:$0xff] %v557
          %938 = vst [vmem:[#allocation3 + $0x70] sm:$0xff] %v563
          %939 = vst [vmem:[#allocation3 + $0x78] sm:$0xff] %v569
          %940 = vst [vmem:[#allocation3 + $0x80] sm:$0xff] %v575
          %941 = vst [vmem:[#allocation3 + $0x88] sm:$0xff] %v581
          %942 = vst [vmem:[#allocation3 + $0x90] sm:$0xff] %v587
          %943 = vst [vmem:[#allocation3 + $0x98] sm:$0xff] %v593
          %944 = vst [vmem:[#allocation3 + $0xa0] sm:$0xff] %v599
          %945 = vst [vmem:[#allocation3 + $0xa8] sm:$0xff] %v605
          %946 = vst [vmem:[#allocation3 + $0xb0] sm:$0xff] %v611
          %947 = vst [vmem:[#allocation3 + $0xb8] sm:$0xff] %v617
          %948 = vst [vmem:[#allocation3 + $0xc0] sm:$0xff] %v623
          %949 = vst [vmem:[#allocation3 + $0xc8] sm:$0xff] %v629
          %950 = vst [vmem:[#allocation3 + $0xd0] sm:$0xff] %v635
          %951 = vst [vmem:[#allocation3 + $0xd8] sm:$0xff] %v641
          %952 = vst [vmem:[#allocation3 + $0xe0] sm:$0xff] %v647
          %953 = vst [vmem:[#allocation3 + $0xe8] sm:$0xff] %v653
          %954 = vst [vmem:[#allocation3 + $0xf0] sm:$0xff] %v659
          %955 = vst [vmem:[#allocation3 + $0xf8] sm:$0xff] %v665
          %956 = vst [vmem:[#allocation4] sm:$0xff] %v734
          %957 = vst [vmem:[#allocation4 + $0x8] sm:$0xff] %v739
          %958 = vst [vmem:[#allocation4 + $0x10] sm:$0xff] %v744
          %959 = vst [vmem:[#allocation4 + $0x18] sm:$0xff] %v749
          %960 = vst [vmem:[#allocation4 + $0x20] sm:$0xff] %v754
          %961 = vst [vmem:[#allocation4 + $0x28] sm:$0xff] %v759
          %962 = vst [vmem:[#allocation4 + $0x30] sm:$0xff] %v764
          %963 = vst [vmem:[#allocation4 + $0x38] sm:$0xff] %v769
          %964 = vst [vmem:[#allocation4 + $0x40] sm:$0xff] %v774
          %965 = vst [vmem:[#allocation4 + $0x48] sm:$0xff] %v779
          %966 = vst [vmem:[#allocation4 + $0x50] sm:$0xff] %v784
          %967 = vst [vmem:[#allocation4 + $0x58] sm:$0xff] %v789
          %968 = vst [vmem:[#allocation4 + $0x60] sm:$0xff] %v794
          %969 = vst [vmem:[#allocation4 + $0x68] sm:$0xff] %v799
          %970 = vst [vmem:[#allocation4 + $0x70] sm:$0xff] %v804
          %971 = vst [vmem:[#allocation4 + $0x78] sm:$0xff] %v809
          %972 = vst [vmem:[#allocation4 + $0x80] sm:$0xff] %v814
          %973 = vst [vmem:[#allocation4 + $0x88] sm:$0xff] %v819
          %974 = vst [vmem:[#allocation4 + $0x90] sm:$0xff] %v824
          %975 = vst [vmem:[#allocation4 + $0x98] sm:$0xff] %v829
          %976 = vst [vmem:[#allocation4 + $0xa0] sm:$0xff] %v834
          %977 = vst [vmem:[#allocation4 + $0xa8] sm:$0xff] %v839
          %978 = vst [vmem:[#allocation4 + $0xb0] sm:$0xff] %v844
          %979 = vst [vmem:[#allocation4 + $0xb8] sm:$0xff] %v849
          %980 = vst [vmem:[#allocation4 + $0xc0] sm:$0xff] %v854
          %981 = vst [vmem:[#allocation4 + $0xc8] sm:$0xff] %v859
          %982 = vst [vmem:[#allocation4 + $0xd0] sm:$0xff] %v864
          %983 = vst [vmem:[#allocation4 + $0xd8] sm:$0xff] %v869
          %984 = vst [vmem:[#allocation4 + $0xe0] sm:$0xff] %v874
          %985 = vst [vmem:[#allocation4 + $0xe8] sm:$0xff] %v879
          %986 = vst [vmem:[#allocation4 + $0xf0] sm:$0xff] %v884
          %987 = vst [vmem:[#allocation4 + $0xf8] sm:$0xff] %v889
        $region36: #{pca_projector.1} parent=31 // pred_fallthru
          _
        %s988 = smul.u32 %s24, 256
        %s989 = scalar_lea.vmem [#allocation2], %s988
        %v990 = vld [vmem:[%s989] sm:$0xff]
        %v991 = vld [vmem:[%s989 + $0x8] sm:$0xff]
        %v992 = vld [vmem:[%s989 + $0x10] sm:$0xff]
        %v993 = vld [vmem:[%s989 + $0x18] sm:$0xff]
        %v994 = vld [vmem:[%s989 + $0x20] sm:$0xff]
        %v995 = vld [vmem:[%s989 + $0x28] sm:$0xff]
        %v996 = vld [vmem:[%s989 + $0x30] sm:$0xff]
        %v997 = vld [vmem:[%s989 + $0x38] sm:$0xff]
        %v998 = vld [vmem:[%s989 + $0x40] sm:$0xff]
        %v999 = vld [vmem:[%s989 + $0x48] sm:$0xff]
        %v1000 = vld [vmem:[%s989 + $0x50] sm:$0xff]
        %v1001 = vld [vmem:[%s989 + $0x58] sm:$0xff]
        %v1002 = vld [vmem:[%s989 + $0x60] sm:$0xff]
        %v1003 = vld [vmem:[%s989 + $0x68] sm:$0xff]
        %v1004 = vld [vmem:[%s989 + $0x70] sm:$0xff]
        %v1005 = vld [vmem:[%s989 + $0x78] sm:$0xff]
        %v1006 = vld [vmem:[%s989 + $0x80] sm:$0xff]
        %v1007 = vld [vmem:[%s989 + $0x88] sm:$0xff]
        %v1008 = vld [vmem:[%s989 + $0x90] sm:$0xff]
        %v1009 = vld [vmem:[%s989 + $0x98] sm:$0xff]
        %v1010 = vld [vmem:[%s989 + $0xa0] sm:$0xff]
        %v1011 = vld [vmem:[%s989 + $0xa8] sm:$0xff]
        %v1012 = vld [vmem:[%s989 + $0xb0] sm:$0xff]
        %v1013 = vld [vmem:[%s989 + $0xb8] sm:$0xff]
        %v1014 = vld [vmem:[%s989 + $0xc0] sm:$0xff]
        %v1015 = vld [vmem:[%s989 + $0xc8] sm:$0xff]
        %v1016 = vld [vmem:[%s989 + $0xd0] sm:$0xff]
        %v1017 = vld [vmem:[%s989 + $0xd8] sm:$0xff]
        %v1018 = vld [vmem:[%s989 + $0xe0] sm:$0xff]
        %v1019 = vld [vmem:[%s989 + $0xe8] sm:$0xff]
        %v1020 = vld [vmem:[%s989 + $0xf0] sm:$0xff]
        %v1021 = vld [vmem:[%s989 + $0xf8] sm:$0xff]
        %v1022 = vld [vmem:[#allocation3] sm:$0xff]
        %v1023 = vld [vmem:[#allocation3 + $0x8] sm:$0xff]
        %v1024 = vld [vmem:[#allocation3 + $0x10] sm:$0xff]
        %v1025 = vld [vmem:[#allocation3 + $0x18] sm:$0xff]
        %v1026 = vld [vmem:[#allocation3 + $0x20] sm:$0xff]
        %v1027 = vld [vmem:[#allocation3 + $0x28] sm:$0xff]
        %v1028 = vld [vmem:[#allocation3 + $0x30] sm:$0xff]
        %v1029 = vld [vmem:[#allocation3 + $0x38] sm:$0xff]
        %v1030 = vld [vmem:[#allocation3 + $0x40] sm:$0xff]
        %v1031 = vld [vmem:[#allocation3 + $0x48] sm:$0xff]
        %v1032 = vld [vmem:[#allocation3 + $0x50] sm:$0xff]
        %v1033 = vld [vmem:[#allocation3 + $0x58] sm:$0xff]
        %v1034 = vld [vmem:[#allocation3 + $0x60] sm:$0xff]
        %v1035 = vld [vmem:[#allocation3 + $0x68] sm:$0xff]
        %v1036 = vld [vmem:[#allocation3 + $0x70] sm:$0xff]
        %v1037 = vld [vmem:[#allocation3 + $0x78] sm:$0xff]
        %v1038 = vld [vmem:[#allocation3 + $0x80] sm:$0xff]
        %v1039 = vld [vmem:[#allocation3 + $0x88] sm:$0xff]
        %v1040 = vld [vmem:[#allocation3 + $0x90] sm:$0xff]
        %v1041 = vld [vmem:[#allocation3 + $0x98] sm:$0xff]
        %v1042 = vld [vmem:[#allocation3 + $0xa0] sm:$0xff]
        %v1043 = vld [vmem:[#allocation3 + $0xa8] sm:$0xff]
        %v1044 = vld [vmem:[#allocation3 + $0xb0] sm:$0xff]
        %v1045 = vld [vmem:[#allocation3 + $0xb8] sm:$0xff]
        %v1046 = vld [vmem:[#allocation3 + $0xc0] sm:$0xff]
        %v1047 = vld [vmem:[#allocation3 + $0xc8] sm:$0xff]
        %v1048 = vld [vmem:[#allocation3 + $0xd0] sm:$0xff]
        %v1049 = vld [vmem:[#allocation3 + $0xd8] sm:$0xff]
        %v1050 = vld [vmem:[#allocation3 + $0xe0] sm:$0xff]
        %v1051 = vld [vmem:[#allocation3 + $0xe8] sm:$0xff]
        %v1052 = vld [vmem:[#allocation3 + $0xf0] sm:$0xff]
        %v1053 = vld [vmem:[#allocation3 + $0xf8] sm:$0xff]
        %1054 = vmatprep.subr.mxu0 0.0
        %1055 = vmatpush1.xpose.msra.mxu0 %v1037
        %1056 = vmatprep.subr.mxu0 0.0
        %1057 = vmatpush1.xpose.msra.mxu0 %v1036
        %1058 = vmatprep.subr.mxu0 0.0
        %1059 = vmatpush1.xpose.msra.mxu0 %v1035
        %1060 = vmatprep.subr.mxu0 0.0
        %1061 = vmatpush1.xpose.msra.mxu0 %v1034
        %1062 = vmatprep.subr.mxu0 0.0
        %1063 = vmatpush1.xpose.msra.mxu0 %v1033
        %1064 = vmatprep.subr.mxu0 0.0
        %1065 = vmatpush1.xpose.msra.mxu0 %v1032
        %1066 = vmatprep.subr.mxu0 0.0
        %1067 = vmatpush1.xpose.msra.mxu0 %v1031
        %1068 = vmatprep.subr.mxu0 0.0
        %1069 = vmatpush1.xpose.msra.mxu0 %v1030
        %1070 = vmatprep.subr.mxu0 0.0
        %1071 = vmatpush1.xpose.msra.mxu0 %v1029
        %1072 = vmatprep.subr.mxu0 0.0
        %1073 = vmatpush1.xpose.msra.mxu0 %v1028
        %1074 = vmatprep.subr.mxu0 0.0
        %1075 = vmatpush1.xpose.msra.mxu0 %v1027
        %1076 = vmatprep.subr.mxu0 0.0
        %1077 = vmatpush1.xpose.msra.mxu0 %v1026
        %1078 = vmatprep.subr.mxu0 0.0
        %1079 = vmatpush1.xpose.msra.mxu0 %v1025
        %1080 = vmatprep.subr.mxu0 0.0
        %1081 = vmatpush1.xpose.msra.mxu0 %v1024
        %1082 = vmatprep.subr.mxu0 0.0
        %1083 = vmatpush1.xpose.msra.mxu0 %v1023
        %1084 = vmatprep.subr.mxu0 0.0
        %1085 = vmatpush1.xpose.msra.mxu0 %v1022
        %1086 = vmatprep.subr.mxu0 0.0
        %1087 = vmatpush2.xpose.msra.mxu0 %v1053
        %1088 = vmatprep.subr.mxu0 0.0
        %1089 = vmatpush2.xpose.msra.mxu0 %v1052
        %1090 = vmatprep.subr.mxu0 0.0
        %1091 = vmatpush2.xpose.msra.mxu0 %v1051
        %1092 = vmatprep.subr.mxu0 0.0
        %1093 = vmatpush2.xpose.msra.mxu0 %v1050
        %1094 = vmatprep.subr.mxu0 0.0
        %1095 = vmatpush2.xpose.msra.mxu0 %v1049
        %1096 = vmatprep.subr.mxu0 0.0
        %1097 = vmatpush2.xpose.msra.mxu0 %v1048
        %1098 = vmatprep.subr.mxu0 0.0
        %1099 = vmatpush2.xpose.msra.mxu0 %v1047
        %1100 = vmatprep.subr.mxu0 0.0
        %1101 = vmatpush2.xpose.msra.mxu0 %v1046
        %1102 = vmatprep.subr.mxu0 0.0
        %1103 = vmatpush2.xpose.msra.mxu0 %v1045
        %1104 = vmatprep.subr.mxu0 0.0
        %1105 = vmatpush2.xpose.msra.mxu0 %v1044
        %1106 = vmatprep.subr.mxu0 0.0
        %1107 = vmatpush2.xpose.msra.mxu0 %v1043
        %1108 = vmatprep.subr.mxu0 0.0
        %1109 = vmatpush2.xpose.msra.mxu0 %v1042
        %1110 = vmatprep.subr.mxu0 0.0
        %1111 = vmatpush2.xpose.msra.mxu0 %v1041
        %1112 = vmatprep.subr.mxu0 0.0
        %1113 = vmatpush2.xpose.msra.mxu0 %v1040
        %1114 = vmatprep.subr.mxu0 0.0
        %1115 = vmatpush2.xpose.msra.mxu0 %v1039
        %1116 = vmatprep.subr.mxu0 0.0
        %1117 = vmatpush2.xpose.msra.mxu0 %v1038
        %1118 = vmatprep.mubr.f32.mxu0 0.0
        %1119 = vmatmul.mubr.f32.gmra.mxu0 %v990
        %v1120 = vpop.f32.mrf.mxu0
        %v1121 = vadd.f32 0.0, %v1120
        %v1122 = vpop.f32.mrf.mxu0
        %v1123 = vadd.f32 0.0, %v1122
        %1124 = vmatprep.mubr.f32.mxu0 0.0
        %1125 = vmatmul.mubr.f32.gmra.mxu0 %v991
        %v1126 = vpop.f32.mrf.mxu0
        %v1127 = vadd.f32 0.0, %v1126
        %v1128 = vpop.f32.mrf.mxu0
        %v1129 = vadd.f32 0.0, %v1128
        %1130 = vmatprep.mubr.f32.mxu0 0.0
        %1131 = vmatmul.mubr.f32.gmra.mxu0 %v992
        %v1132 = vpop.f32.mrf.mxu0
        %v1133 = vadd.f32 0.0, %v1132
        %v1134 = vpop.f32.mrf.mxu0
        %v1135 = vadd.f32 0.0, %v1134
        %1136 = vmatprep.mubr.f32.mxu0 0.0
        %1137 = vmatmul.mubr.f32.gmra.mxu0 %v993
        %v1138 = vpop.f32.mrf.mxu0
        %v1139 = vadd.f32 0.0, %v1138
        %v1140 = vpop.f32.mrf.mxu0
        %v1141 = vadd.f32 0.0, %v1140
        %1142 = vmatprep.mubr.f32.mxu0 0.0
        %1143 = vmatmul.mubr.f32.gmra.mxu0 %v994
        %v1144 = vpop.f32.mrf.mxu0
        %v1145 = vadd.f32 0.0, %v1144
        %v1146 = vpop.f32.mrf.mxu0
        %v1147 = vadd.f32 0.0, %v1146
        %1148 = vmatprep.mubr.f32.mxu0 0.0
        %1149 = vmatmul.mubr.f32.gmra.mxu0 %v995
        %v1150 = vpop.f32.mrf.mxu0
        %v1151 = vadd.f32 0.0, %v1150
        %v1152 = vpop.f32.mrf.mxu0
        %v1153 = vadd.f32 0.0, %v1152
        %1154 = vmatprep.mubr.f32.mxu0 0.0
        %1155 = vmatmul.mubr.f32.gmra.mxu0 %v996
        %v1156 = vpop.f32.mrf.mxu0
        %v1157 = vadd.f32 0.0, %v1156
        %v1158 = vpop.f32.mrf.mxu0
        %v1159 = vadd.f32 0.0, %v1158
        %1160 = vmatprep.mubr.f32.mxu0 0.0
        %1161 = vmatmul.mubr.f32.gmra.mxu0 %v997
        %v1162 = vpop.f32.mrf.mxu0
        %v1163 = vadd.f32 0.0, %v1162
        %v1164 = vpop.f32.mrf.mxu0
        %v1165 = vadd.f32 0.0, %v1164
        %1166 = vmatprep.mubr.f32.mxu0 0.0
        %1167 = vmatmul.mubr.f32.gmra.mxu0 %v998
        %v1168 = vpop.f32.mrf.mxu0
        %v1169 = vadd.f32 0.0, %v1168
        %v1170 = vpop.f32.mrf.mxu0
        %v1171 = vadd.f32 0.0, %v1170
        %1172 = vmatprep.mubr.f32.mxu0 0.0
        %1173 = vmatmul.mubr.f32.gmra.mxu0 %v999
        %v1174 = vpop.f32.mrf.mxu0
        %v1175 = vadd.f32 0.0, %v1174
        %v1176 = vpop.f32.mrf.mxu0
        %v1177 = vadd.f32 0.0, %v1176
        %1178 = vmatprep.mubr.f32.mxu0 0.0
        %1179 = vmatmul.mubr.f32.gmra.mxu0 %v1000
        %v1180 = vpop.f32.mrf.mxu0
        %v1181 = vadd.f32 0.0, %v1180
        %v1182 = vpop.f32.mrf.mxu0
        %v1183 = vadd.f32 0.0, %v1182
        %1184 = vmatprep.mubr.f32.mxu0 0.0
        %1185 = vmatmul.mubr.f32.gmra.mxu0 %v1001
        %v1186 = vpop.f32.mrf.mxu0
        %v1187 = vadd.f32 0.0, %v1186
        %v1188 = vpop.f32.mrf.mxu0
        %v1189 = vadd.f32 0.0, %v1188
        %1190 = vmatprep.mubr.f32.mxu0 0.0
        %1191 = vmatmul.mubr.f32.gmra.mxu0 %v1002
        %v1192 = vpop.f32.mrf.mxu0
        %v1193 = vadd.f32 0.0, %v1192
        %v1194 = vpop.f32.mrf.mxu0
        %v1195 = vadd.f32 0.0, %v1194
        %1196 = vmatprep.mubr.f32.mxu0 0.0
        %1197 = vmatmul.mubr.f32.gmra.mxu0 %v1003
        %v1198 = vpop.f32.mrf.mxu0
        %v1199 = vadd.f32 0.0, %v1198
        %v1200 = vpop.f32.mrf.mxu0
        %v1201 = vadd.f32 0.0, %v1200
        %1202 = vmatprep.mubr.f32.mxu0 0.0
        %1203 = vmatmul.mubr.f32.gmra.mxu0 %v1004
        %v1204 = vpop.f32.mrf.mxu0
        %v1205 = vadd.f32 0.0, %v1204
        %v1206 = vpop.f32.mrf.mxu0
        %v1207 = vadd.f32 0.0, %v1206
        %1208 = vmatprep.mubr.f32.mxu0 0.0
        %1209 = vmatmul.mubr.f32.gmra.mxu0 %v1005
        %v1210 = vpop.f32.mrf.mxu0
        %v1211 = vadd.f32 0.0, %v1210
        %v1212 = vpop.f32.mrf.mxu0
        %v1213 = vadd.f32 0.0, %v1212
        %1214 = vmatprep.mubr.f32.mxu0 0.0
        %1215 = vmatmul.mubr.f32.gmra.mxu0 %v1006
        %v1216 = vpop.f32.mrf.mxu0
        %v1217 = vadd.f32 0.0, %v1216
        %v1218 = vpop.f32.mrf.mxu0
        %v1219 = vadd.f32 0.0, %v1218
        %1220 = vmatprep.mubr.f32.mxu0 0.0
        %1221 = vmatmul.mubr.f32.gmra.mxu0 %v1007
        %v1222 = vpop.f32.mrf.mxu0
        %v1223 = vadd.f32 0.0, %v1222
        %v1224 = vpop.f32.mrf.mxu0
        %v1225 = vadd.f32 0.0, %v1224
        %1226 = vmatprep.mubr.f32.mxu0 0.0
        %1227 = vmatmul.mubr.f32.gmra.mxu0 %v1008
        %v1228 = vpop.f32.mrf.mxu0
        %v1229 = vadd.f32 0.0, %v1228
        %v1230 = vpop.f32.mrf.mxu0
        %v1231 = vadd.f32 0.0, %v1230
        %1232 = vmatprep.mubr.f32.mxu0 0.0
        %1233 = vmatmul.mubr.f32.gmra.mxu0 %v1009
        %v1234 = vpop.f32.mrf.mxu0
        %v1235 = vadd.f32 0.0, %v1234
        %v1236 = vpop.f32.mrf.mxu0
        %v1237 = vadd.f32 0.0, %v1236
        %1238 = vmatprep.mubr.f32.mxu0 0.0
        %1239 = vmatmul.mubr.f32.gmra.mxu0 %v1010
        %v1240 = vpop.f32.mrf.mxu0
        %v1241 = vadd.f32 0.0, %v1240
        %v1242 = vpop.f32.mrf.mxu0
        %v1243 = vadd.f32 0.0, %v1242
        %1244 = vmatprep.mubr.f32.mxu0 0.0
        %1245 = vmatmul.mubr.f32.gmra.mxu0 %v1011
        %v1246 = vpop.f32.mrf.mxu0
        %v1247 = vadd.f32 0.0, %v1246
        %v1248 = vpop.f32.mrf.mxu0
        %v1249 = vadd.f32 0.0, %v1248
        %1250 = vmatprep.mubr.f32.mxu0 0.0
        %1251 = vmatmul.mubr.f32.gmra.mxu0 %v1012
        %v1252 = vpop.f32.mrf.mxu0
        %v1253 = vadd.f32 0.0, %v1252
        %v1254 = vpop.f32.mrf.mxu0
        %v1255 = vadd.f32 0.0, %v1254
        %1256 = vmatprep.mubr.f32.mxu0 0.0
        %1257 = vmatmul.mubr.f32.gmra.mxu0 %v1013
        %v1258 = vpop.f32.mrf.mxu0
        %v1259 = vadd.f32 0.0, %v1258
        %v1260 = vpop.f32.mrf.mxu0
        %v1261 = vadd.f32 0.0, %v1260
        %1262 = vmatprep.mubr.f32.mxu0 0.0
        %1263 = vmatmul.mubr.f32.gmra.mxu0 %v1014
        %v1264 = vpop.f32.mrf.mxu0
        %v1265 = vadd.f32 0.0, %v1264
        %v1266 = vpop.f32.mrf.mxu0
        %v1267 = vadd.f32 0.0, %v1266
        %1268 = vmatprep.mubr.f32.mxu0 0.0
        %1269 = vmatmul.mubr.f32.gmra.mxu0 %v1015
        %v1270 = vpop.f32.mrf.mxu0
        %v1271 = vadd.f32 0.0, %v1270
        %v1272 = vpop.f32.mrf.mxu0
        %v1273 = vadd.f32 0.0, %v1272
        %1274 = vmatprep.mubr.f32.mxu0 0.0
        %1275 = vmatmul.mubr.f32.gmra.mxu0 %v1016
        %v1276 = vpop.f32.mrf.mxu0
        %v1277 = vadd.f32 0.0, %v1276
        %v1278 = vpop.f32.mrf.mxu0
        %v1279 = vadd.f32 0.0, %v1278
        %1280 = vmatprep.mubr.f32.mxu0 0.0
        %1281 = vmatmul.mubr.f32.gmra.mxu0 %v1017
        %v1282 = vpop.f32.mrf.mxu0
        %v1283 = vadd.f32 0.0, %v1282
        %v1284 = vpop.f32.mrf.mxu0
        %v1285 = vadd.f32 0.0, %v1284
        %1286 = vmatprep.mubr.f32.mxu0 0.0
        %1287 = vmatmul.mubr.f32.gmra.mxu0 %v1018
        %v1288 = vpop.f32.mrf.mxu0
        %v1289 = vadd.f32 0.0, %v1288
        %v1290 = vpop.f32.mrf.mxu0
        %v1291 = vadd.f32 0.0, %v1290
        %1292 = vmatprep.mubr.f32.mxu0 0.0
        %1293 = vmatmul.mubr.f32.gmra.mxu0 %v1019
        %v1294 = vpop.f32.mrf.mxu0
        %v1295 = vadd.f32 0.0, %v1294
        %v1296 = vpop.f32.mrf.mxu0
        %v1297 = vadd.f32 0.0, %v1296
        %1298 = vmatprep.mubr.f32.mxu0 0.0
        %1299 = vmatmul.mubr.f32.gmra.mxu0 %v1020
        %v1300 = vpop.f32.mrf.mxu0
        %v1301 = vadd.f32 0.0, %v1300
        %v1302 = vpop.f32.mrf.mxu0
        %v1303 = vadd.f32 0.0, %v1302
        %1304 = vmatprep.mubr.f32.mxu0 0.0
        %1305 = vmatmul.mubr.f32.gmra.mxu0 %v1021
        %v1306 = vpop.f32.mrf.mxu0
        %v1307 = vadd.f32 0.0, %v1306
        %v1308 = vpop.f32.mrf.mxu0
        %v1309 = vadd.f32 0.0, %v1308
        %1310 = vdwg.mxu0
        %v1311 = vmax.f32 %v1121, %v1123
        %1312 = vmax.xlane.f32.xlu0 %v1311
        %v1313 = vpop.xlane.xlu0 %1312
        %v1314 = vmax.f32 %v1127, %v1129
        %1315 = vmax.xlane.f32.xlu0 %v1314
        %v1316 = vpop.xlane.xlu0 %1315
        %v1317 = vmax.f32 %v1133, %v1135
        %1318 = vmax.xlane.f32.xlu0 %v1317
        %v1319 = vpop.xlane.xlu0 %1318
        %v1320 = vmax.f32 %v1139, %v1141
        %1321 = vmax.xlane.f32.xlu0 %v1320
        %v1322 = vpop.xlane.xlu0 %1321
        %v1323 = vmax.f32 %v1145, %v1147
        %1324 = vmax.xlane.f32.xlu0 %v1323
        %v1325 = vpop.xlane.xlu0 %1324
        %v1326 = vmax.f32 %v1151, %v1153
        %1327 = vmax.xlane.f32.xlu0 %v1326
        %v1328 = vpop.xlane.xlu0 %1327
        %v1329 = vmax.f32 %v1157, %v1159
        %1330 = vmax.xlane.f32.xlu0 %v1329
        %v1331 = vpop.xlane.xlu0 %1330
        %v1332 = vmax.f32 %v1163, %v1165
        %1333 = vmax.xlane.f32.xlu0 %v1332
        %v1334 = vpop.xlane.xlu0 %1333
        %v1335 = vmax.f32 %v1169, %v1171
        %1336 = vmax.xlane.f32.xlu0 %v1335
        %v1337 = vpop.xlane.xlu0 %1336
        %v1338 = vmax.f32 %v1175, %v1177
        %1339 = vmax.xlane.f32.xlu0 %v1338
        %v1340 = vpop.xlane.xlu0 %1339
        %v1341 = vmax.f32 %v1181, %v1183
        %1342 = vmax.xlane.f32.xlu0 %v1341
        %v1343 = vpop.xlane.xlu0 %1342
        %v1344 = vmax.f32 %v1187, %v1189
        %1345 = vmax.xlane.f32.xlu0 %v1344
        %v1346 = vpop.xlane.xlu0 %1345
        %v1347 = vmax.f32 %v1193, %v1195
        %1348 = vmax.xlane.f32.xlu0 %v1347
        %v1349 = vpop.xlane.xlu0 %1348
        %v1350 = vmax.f32 %v1199, %v1201
        %1351 = vmax.xlane.f32.xlu0 %v1350
        %v1352 = vpop.xlane.xlu0 %1351
        %v1353 = vmax.f32 %v1205, %v1207
        %1354 = vmax.xlane.f32.xlu0 %v1353
        %v1355 = vpop.xlane.xlu0 %1354
        %v1356 = vmax.f32 %v1211, %v1213
        %1357 = vmax.xlane.f32.xlu0 %v1356
        %v1358 = vpop.xlane.xlu0 %1357
        %v1359 = vmax.f32 %v1217, %v1219
        %1360 = vmax.xlane.f32.xlu0 %v1359
        %v1361 = vpop.xlane.xlu0 %1360
        %v1362 = vmax.f32 %v1223, %v1225
        %1363 = vmax.xlane.f32.xlu0 %v1362
        %v1364 = vpop.xlane.xlu0 %1363
        %v1365 = vmax.f32 %v1229, %v1231
        %1366 = vmax.xlane.f32.xlu0 %v1365
        %v1367 = vpop.xlane.xlu0 %1366
        %v1368 = vmax.f32 %v1235, %v1237
        %1369 = vmax.xlane.f32.xlu0 %v1368
        %v1370 = vpop.xlane.xlu0 %1369
        %v1371 = vmax.f32 %v1241, %v1243
        %1372 = vmax.xlane.f32.xlu0 %v1371
        %v1373 = vpop.xlane.xlu0 %1372
        %v1374 = vmax.f32 %v1247, %v1249
        %1375 = vmax.xlane.f32.xlu0 %v1374
        %v1376 = vpop.xlane.xlu0 %1375
        %v1377 = vmax.f32 %v1253, %v1255
        %1378 = vmax.xlane.f32.xlu0 %v1377
        %v1379 = vpop.xlane.xlu0 %1378
        %v1380 = vmax.f32 %v1259, %v1261
        %1381 = vmax.xlane.f32.xlu0 %v1380
        %v1382 = vpop.xlane.xlu0 %1381
        %v1383 = vmax.f32 %v1265, %v1267
        %1384 = vmax.xlane.f32.xlu0 %v1383
        %v1385 = vpop.xlane.xlu0 %1384
        %v1386 = vmax.f32 %v1271, %v1273
        %1387 = vmax.xlane.f32.xlu0 %v1386
        %v1388 = vpop.xlane.xlu0 %1387
        %v1389 = vmax.f32 %v1277, %v1279
        %1390 = vmax.xlane.f32.xlu0 %v1389
        %v1391 = vpop.xlane.xlu0 %1390
        %v1392 = vmax.f32 %v1283, %v1285
        %1393 = vmax.xlane.f32.xlu0 %v1392
        %v1394 = vpop.xlane.xlu0 %1393
        %v1395 = vmax.f32 %v1289, %v1291
        %1396 = vmax.xlane.f32.xlu0 %v1395
        %v1397 = vpop.xlane.xlu0 %1396
        %v1398 = vmax.f32 %v1295, %v1297
        %1399 = vmax.xlane.f32.xlu0 %v1398
        %v1400 = vpop.xlane.xlu0 %1399
        %v1401 = vmax.f32 %v1301, %v1303
        %1402 = vmax.xlane.f32.xlu0 %v1401
        %v1403 = vpop.xlane.xlu0 %1402
        %v1404 = vmax.f32 %v1307, %v1309
        %1405 = vmax.xlane.f32.xlu0 %v1404
        %v1406 = vpop.xlane.xlu0 %1405
        %v1407 = vsub.f32 %v1121, %v1313
        %v1408 = vsub.f32 %v1123, %v1313
        %v1409 = vsub.f32 %v1127, %v1316
        %v1410 = vsub.f32 %v1129, %v1316
        %v1411 = vsub.f32 %v1133, %v1319
        %v1412 = vsub.f32 %v1135, %v1319
        %v1413 = vsub.f32 %v1139, %v1322
        %v1414 = vsub.f32 %v1141, %v1322
        %v1415 = vsub.f32 %v1145, %v1325
        %v1416 = vsub.f32 %v1147, %v1325
        %v1417 = vsub.f32 %v1151, %v1328
        %v1418 = vsub.f32 %v1153, %v1328
        %v1419 = vsub.f32 %v1157, %v1331
        %v1420 = vsub.f32 %v1159, %v1331
        %v1421 = vsub.f32 %v1163, %v1334
        %v1422 = vsub.f32 %v1165, %v1334
        %v1423 = vsub.f32 %v1169, %v1337
        %v1424 = vsub.f32 %v1171, %v1337
        %v1425 = vsub.f32 %v1175, %v1340
        %v1426 = vsub.f32 %v1177, %v1340
        %v1427 = vsub.f32 %v1181, %v1343
        %v1428 = vsub.f32 %v1183, %v1343
        %v1429 = vsub.f32 %v1187, %v1346
        %v1430 = vsub.f32 %v1189, %v1346
        %v1431 = vsub.f32 %v1193, %v1349
        %v1432 = vsub.f32 %v1195, %v1349
        %v1433 = vsub.f32 %v1199, %v1352
        %v1434 = vsub.f32 %v1201, %v1352
        %v1435 = vsub.f32 %v1205, %v1355
        %v1436 = vsub.f32 %v1207, %v1355
        %v1437 = vsub.f32 %v1211, %v1358
        %v1438 = vsub.f32 %v1213, %v1358
        %v1439 = vsub.f32 %v1217, %v1361
        %v1440 = vsub.f32 %v1219, %v1361
        %v1441 = vsub.f32 %v1223, %v1364
        %v1442 = vsub.f32 %v1225, %v1364
        %v1443 = vsub.f32 %v1229, %v1367
        %v1444 = vsub.f32 %v1231, %v1367
        %v1445 = vsub.f32 %v1235, %v1370
        %v1446 = vsub.f32 %v1237, %v1370
        %v1447 = vsub.f32 %v1241, %v1373
        %v1448 = vsub.f32 %v1243, %v1373
        %v1449 = vsub.f32 %v1247, %v1376
        %v1450 = vsub.f32 %v1249, %v1376
        %v1451 = vsub.f32 %v1253, %v1379
        %v1452 = vsub.f32 %v1255, %v1379
        %v1453 = vsub.f32 %v1259, %v1382
        %v1454 = vsub.f32 %v1261, %v1382
        %v1455 = vsub.f32 %v1265, %v1385
        %v1456 = vsub.f32 %v1267, %v1385
        %v1457 = vsub.f32 %v1271, %v1388
        %v1458 = vsub.f32 %v1273, %v1388
        %v1459 = vsub.f32 %v1277, %v1391
        %v1460 = vsub.f32 %v1279, %v1391
        %v1461 = vsub.f32 %v1283, %v1394
        %v1462 = vsub.f32 %v1285, %v1394
        %v1463 = vsub.f32 %v1289, %v1397
        %v1464 = vsub.f32 %v1291, %v1397
        %v1465 = vsub.f32 %v1295, %v1400
        %v1466 = vsub.f32 %v1297, %v1400
        %v1467 = vsub.f32 %v1301, %v1403
        %v1468 = vsub.f32 %v1303, %v1403
        %v1469 = vsub.f32 %v1307, %v1406
        %v1470 = vsub.f32 %v1309, %v1406
        %v1471 = vmul.f32 %v1407, 1.442695
        %v1472 = vpow.pop %v1471
        %v1473 = vmul.f32 %v1408, 1.442695
        %v1474 = vpow.pop %v1473
        %v1475 = vmul.f32 %v1409, 1.442695
        %v1476 = vpow.pop %v1475
        %v1477 = vmul.f32 %v1410, 1.442695
        %v1478 = vpow.pop %v1477
        %v1479 = vmul.f32 %v1411, 1.442695
        %v1480 = vpow.pop %v1479
        %v1481 = vmul.f32 %v1412, 1.442695
        %v1482 = vpow.pop %v1481
        %v1483 = vmul.f32 %v1413, 1.442695
        %v1484 = vpow.pop %v1483
        %v1485 = vmul.f32 %v1414, 1.442695
        %v1486 = vpow.pop %v1485
        %v1487 = vmul.f32 %v1415, 1.442695
        %v1488 = vpow.pop %v1487
        %v1489 = vmul.f32 %v1416, 1.442695
        %v1490 = vpow.pop %v1489
        %v1491 = vmul.f32 %v1417, 1.442695
        %v1492 = vpow.pop %v1491
        %v1493 = vmul.f32 %v1418, 1.442695
        %v1494 = vpow.pop %v1493
        %v1495 = vmul.f32 %v1419, 1.442695
        %v1496 = vpow.pop %v1495
        %v1497 = vmul.f32 %v1420, 1.442695
        %v1498 = vpow.pop %v1497
        %v1499 = vmul.f32 %v1421, 1.442695
        %v1500 = vpow.pop %v1499
        %v1501 = vmul.f32 %v1422, 1.442695
        %v1502 = vpow.pop %v1501
        %v1503 = vmul.f32 %v1423, 1.442695
        %v1504 = vpow.pop %v1503
        %v1505 = vmul.f32 %v1424, 1.442695
        %v1506 = vpow.pop %v1505
        %v1507 = vmul.f32 %v1425, 1.442695
        %v1508 = vpow.pop %v1507
        %v1509 = vmul.f32 %v1426, 1.442695
        %v1510 = vpow.pop %v1509
        %v1511 = vmul.f32 %v1427, 1.442695
        %v1512 = vpow.pop %v1511
        %v1513 = vmul.f32 %v1428, 1.442695
        %v1514 = vpow.pop %v1513
        %v1515 = vmul.f32 %v1429, 1.442695
        %v1516 = vpow.pop %v1515
        %v1517 = vmul.f32 %v1430, 1.442695
        %v1518 = vpow.pop %v1517
        %v1519 = vmul.f32 %v1431, 1.442695
        %v1520 = vpow.pop %v1519
        %v1521 = vmul.f32 %v1432, 1.442695
        %v1522 = vpow.pop %v1521
        %v1523 = vmul.f32 %v1433, 1.442695
        %v1524 = vpow.pop %v1523
        %v1525 = vmul.f32 %v1434, 1.442695
        %v1526 = vpow.pop %v1525
        %v1527 = vmul.f32 %v1435, 1.442695
        %v1528 = vpow.pop %v1527
        %v1529 = vmul.f32 %v1436, 1.442695
        %v1530 = vpow.pop %v1529
        %v1531 = vmul.f32 %v1437, 1.442695
        %v1532 = vpow.pop %v1531
        %v1533 = vmul.f32 %v1438, 1.442695
        %v1534 = vpow.pop %v1533
        %v1535 = vmul.f32 %v1439, 1.442695
        %v1536 = vpow.pop %v1535
        %v1537 = vmul.f32 %v1440, 1.442695
        %v1538 = vpow.pop %v1537
        %v1539 = vmul.f32 %v1441, 1.442695
        %v1540 = vpow.pop %v1539
        %v1541 = vmul.f32 %v1442, 1.442695
        %v1542 = vpow.pop %v1541
        %v1543 = vmul.f32 %v1443, 1.442695
        %v1544 = vpow.pop %v1543
        %v1545 = vmul.f32 %v1444, 1.442695
        %v1546 = vpow.pop %v1545
        %v1547 = vmul.f32 %v1445, 1.442695
        %v1548 = vpow.pop %v1547
        %v1549 = vmul.f32 %v1446, 1.442695
        %v1550 = vpow.pop %v1549
        %v1551 = vmul.f32 %v1447, 1.442695
        %v1552 = vpow.pop %v1551
        %v1553 = vmul.f32 %v1448, 1.442695
        %v1554 = vpow.pop %v1553
        %v1555 = vmul.f32 %v1449, 1.442695
        %v1556 = vpow.pop %v1555
        %v1557 = vmul.f32 %v1450, 1.442695
        %v1558 = vpow.pop %v1557
        %v1559 = vmul.f32 %v1451, 1.442695
        %v1560 = vpow.pop %v1559
        %v1561 = vmul.f32 %v1452, 1.442695
        %v1562 = vpow.pop %v1561
        %v1563 = vmul.f32 %v1453, 1.442695
        %v1564 = vpow.pop %v1563
        %v1565 = vmul.f32 %v1454, 1.442695
        %v1566 = vpow.pop %v1565
        %v1567 = vmul.f32 %v1455, 1.442695
        %v1568 = vpow.pop %v1567
        %v1569 = vmul.f32 %v1456, 1.442695
        %v1570 = vpow.pop %v1569
        %v1571 = vmul.f32 %v1457, 1.442695
        %v1572 = vpow.pop %v1571
        %v1573 = vmul.f32 %v1458, 1.442695
        %v1574 = vpow.pop %v1573
        %v1575 = vmul.f32 %v1459, 1.442695
        %v1576 = vpow.pop %v1575
        %v1577 = vmul.f32 %v1460, 1.442695
        %v1578 = vpow.pop %v1577
        %v1579 = vmul.f32 %v1461, 1.442695
        %v1580 = vpow.pop %v1579
        %v1581 = vmul.f32 %v1462, 1.442695
        %v1582 = vpow.pop %v1581
        %v1583 = vmul.f32 %v1463, 1.442695
        %v1584 = vpow.pop %v1583
        %v1585 = vmul.f32 %v1464, 1.442695
        %v1586 = vpow.pop %v1585
        %v1587 = vmul.f32 %v1465, 1.442695
        %v1588 = vpow.pop %v1587
        %v1589 = vmul.f32 %v1466, 1.442695
        %v1590 = vpow.pop %v1589
        %v1591 = vmul.f32 %v1467, 1.442695
        %v1592 = vpow.pop %v1591
        %v1593 = vmul.f32 %v1468, 1.442695
        %v1594 = vpow.pop %v1593
        %v1595 = vmul.f32 %v1469, 1.442695
        %v1596 = vpow.pop %v1595
        %v1597 = vmul.f32 %v1470, 1.442695
        %v1598 = vpow.pop %v1597
        %v1599 = vadd.f32 %v1472, %v1474
        %1600 = vadd.xlane.f32.xlu0 %v1599
        %v1601 = vpop.xlane.xlu0 %1600
        %v1602 = vadd.f32 %v1476, %v1478
        %1603 = vadd.xlane.f32.xlu0 %v1602
        %v1604 = vpop.xlane.xlu0 %1603
        %v1605 = vadd.f32 %v1480, %v1482
        %1606 = vadd.xlane.f32.xlu0 %v1605
        %v1607 = vpop.xlane.xlu0 %1606
        %v1608 = vadd.f32 %v1484, %v1486
        %1609 = vadd.xlane.f32.xlu0 %v1608
        %v1610 = vpop.xlane.xlu0 %1609
        %v1611 = vadd.f32 %v1488, %v1490
        %1612 = vadd.xlane.f32.xlu0 %v1611
        %v1613 = vpop.xlane.xlu0 %1612
        %v1614 = vadd.f32 %v1492, %v1494
        %1615 = vadd.xlane.f32.xlu0 %v1614
        %v1616 = vpop.xlane.xlu0 %1615
        %v1617 = vadd.f32 %v1496, %v1498
        %1618 = vadd.xlane.f32.xlu0 %v1617
        %v1619 = vpop.xlane.xlu0 %1618
        %v1620 = vadd.f32 %v1500, %v1502
        %1621 = vadd.xlane.f32.xlu0 %v1620
        %v1622 = vpop.xlane.xlu0 %1621
        %v1623 = vadd.f32 %v1504, %v1506
        %1624 = vadd.xlane.f32.xlu0 %v1623
        %v1625 = vpop.xlane.xlu0 %1624
        %v1626 = vadd.f32 %v1508, %v1510
        %1627 = vadd.xlane.f32.xlu0 %v1626
        %v1628 = vpop.xlane.xlu0 %1627
        %v1629 = vadd.f32 %v1512, %v1514
        %1630 = vadd.xlane.f32.xlu0 %v1629
        %v1631 = vpop.xlane.xlu0 %1630
        %v1632 = vadd.f32 %v1516, %v1518
        %1633 = vadd.xlane.f32.xlu0 %v1632
        %v1634 = vpop.xlane.xlu0 %1633
        %v1635 = vadd.f32 %v1520, %v1522
        %1636 = vadd.xlane.f32.xlu0 %v1635
        %v1637 = vpop.xlane.xlu0 %1636
        %v1638 = vadd.f32 %v1524, %v1526
        %1639 = vadd.xlane.f32.xlu0 %v1638
        %v1640 = vpop.xlane.xlu0 %1639
        %v1641 = vadd.f32 %v1528, %v1530
        %1642 = vadd.xlane.f32.xlu0 %v1641
        %v1643 = vpop.xlane.xlu0 %1642
        %v1644 = vadd.f32 %v1532, %v1534
        %1645 = vadd.xlane.f32.xlu0 %v1644
        %v1646 = vpop.xlane.xlu0 %1645
        %v1647 = vadd.f32 %v1536, %v1538
        %1648 = vadd.xlane.f32.xlu0 %v1647
        %v1649 = vpop.xlane.xlu0 %1648
        %v1650 = vadd.f32 %v1540, %v1542
        %1651 = vadd.xlane.f32.xlu0 %v1650
        %v1652 = vpop.xlane.xlu0 %1651
        %v1653 = vadd.f32 %v1544, %v1546
        %1654 = vadd.xlane.f32.xlu0 %v1653
        %v1655 = vpop.xlane.xlu0 %1654
        %v1656 = vadd.f32 %v1548, %v1550
        %1657 = vadd.xlane.f32.xlu0 %v1656
        %v1658 = vpop.xlane.xlu0 %1657
        %v1659 = vadd.f32 %v1552, %v1554
        %1660 = vadd.xlane.f32.xlu0 %v1659
        %v1661 = vpop.xlane.xlu0 %1660
        %v1662 = vadd.f32 %v1556, %v1558
        %1663 = vadd.xlane.f32.xlu0 %v1662
        %v1664 = vpop.xlane.xlu0 %1663
        %v1665 = vadd.f32 %v1560, %v1562
        %1666 = vadd.xlane.f32.xlu0 %v1665
        %v1667 = vpop.xlane.xlu0 %1666
        %v1668 = vadd.f32 %v1564, %v1566
        %1669 = vadd.xlane.f32.xlu0 %v1668
        %v1670 = vpop.xlane.xlu0 %1669
        %v1671 = vadd.f32 %v1568, %v1570
        %1672 = vadd.xlane.f32.xlu0 %v1671
        %v1673 = vpop.xlane.xlu0 %1672
        %v1674 = vadd.f32 %v1572, %v1574
        %1675 = vadd.xlane.f32.xlu0 %v1674
        %v1676 = vpop.xlane.xlu0 %1675
        %v1677 = vadd.f32 %v1576, %v1578
        %1678 = vadd.xlane.f32.xlu0 %v1677
        %v1679 = vpop.xlane.xlu0 %1678
        %v1680 = vadd.f32 %v1580, %v1582
        %1681 = vadd.xlane.f32.xlu0 %v1680
        %v1682 = vpop.xlane.xlu0 %1681
        %v1683 = vadd.f32 %v1584, %v1586
        %1684 = vadd.xlane.f32.xlu0 %v1683
        %v1685 = vpop.xlane.xlu0 %1684
        %v1686 = vadd.f32 %v1588, %v1590
        %1687 = vadd.xlane.f32.xlu0 %v1686
        %v1688 = vpop.xlane.xlu0 %1687
        %v1689 = vadd.f32 %v1592, %v1594
        %1690 = vadd.xlane.f32.xlu0 %v1689
        %v1691 = vpop.xlane.xlu0 %1690
        %v1692 = vadd.f32 %v1596, %v1598
        %1693 = vadd.xlane.f32.xlu0 %v1692
        %v1694 = vpop.xlane.xlu0 %1693
        %v1695 = vrcp.pop %v1601
        %v1696 = vrcp.pop %v1604
        %v1697 = vrcp.pop %v1607
        %v1698 = vrcp.pop %v1610
        %v1699 = vrcp.pop %v1613
        %v1700 = vrcp.pop %v1616
        %v1701 = vrcp.pop %v1619
        %v1702 = vrcp.pop %v1622
        %v1703 = vrcp.pop %v1625
        %v1704 = vrcp.pop %v1628
        %v1705 = vrcp.pop %v1631
        %v1706 = vrcp.pop %v1634
        %v1707 = vrcp.pop %v1637
        %v1708 = vrcp.pop %v1640
        %v1709 = vrcp.pop %v1643
        %v1710 = vrcp.pop %v1646
        %v1711 = vrcp.pop %v1649
        %v1712 = vrcp.pop %v1652
        %v1713 = vrcp.pop %v1655
        %v1714 = vrcp.pop %v1658
        %v1715 = vrcp.pop %v1661
        %v1716 = vrcp.pop %v1664
        %v1717 = vrcp.pop %v1667
        %v1718 = vrcp.pop %v1670
        %v1719 = vrcp.pop %v1673
        %v1720 = vrcp.pop %v1676
        %v1721 = vrcp.pop %v1679
        %v1722 = vrcp.pop %v1682
        %v1723 = vrcp.pop %v1685
        %v1724 = vrcp.pop %v1688
        %v1725 = vrcp.pop %v1691
        %v1726 = vrcp.pop %v1694
        %v1727 = vmul.f32 %v1472, %v1695
        %v1728 = vmul.f32 %v1474, %v1695
        %v1729 = vmul.f32 %v1476, %v1696
        %v1730 = vmul.f32 %v1478, %v1696
        %v1731 = vmul.f32 %v1480, %v1697
        %v1732 = vmul.f32 %v1482, %v1697
        %v1733 = vmul.f32 %v1484, %v1698
        %v1734 = vmul.f32 %v1486, %v1698
        %v1735 = vmul.f32 %v1488, %v1699
        %v1736 = vmul.f32 %v1490, %v1699
        %v1737 = vmul.f32 %v1492, %v1700
        %v1738 = vmul.f32 %v1494, %v1700
        %v1739 = vmul.f32 %v1496, %v1701
        %v1740 = vmul.f32 %v1498, %v1701
        %v1741 = vmul.f32 %v1500, %v1702
        %v1742 = vmul.f32 %v1502, %v1702
        %v1743 = vmul.f32 %v1504, %v1703
        %v1744 = vmul.f32 %v1506, %v1703
        %v1745 = vmul.f32 %v1508, %v1704
        %v1746 = vmul.f32 %v1510, %v1704
        %v1747 = vmul.f32 %v1512, %v1705
        %v1748 = vmul.f32 %v1514, %v1705
        %v1749 = vmul.f32 %v1516, %v1706
        %v1750 = vmul.f32 %v1518, %v1706
        %v1751 = vmul.f32 %v1520, %v1707
        %v1752 = vmul.f32 %v1522, %v1707
        %v1753 = vmul.f32 %v1524, %v1708
        %v1754 = vmul.f32 %v1526, %v1708
        %v1755 = vmul.f32 %v1528, %v1709
        %v1756 = vmul.f32 %v1530, %v1709
        %v1757 = vmul.f32 %v1532, %v1710
        %v1758 = vmul.f32 %v1534, %v1710
        %v1759 = vmul.f32 %v1536, %v1711
        %v1760 = vmul.f32 %v1538, %v1711
        %v1761 = vmul.f32 %v1540, %v1712
        %v1762 = vmul.f32 %v1542, %v1712
        %v1763 = vmul.f32 %v1544, %v1713
        %v1764 = vmul.f32 %v1546, %v1713
        %v1765 = vmul.f32 %v1548, %v1714
        %v1766 = vmul.f32 %v1550, %v1714
        %v1767 = vmul.f32 %v1552, %v1715
        %v1768 = vmul.f32 %v1554, %v1715
        %v1769 = vmul.f32 %v1556, %v1716
        %v1770 = vmul.f32 %v1558, %v1716
        %v1771 = vmul.f32 %v1560, %v1717
        %v1772 = vmul.f32 %v1562, %v1717
        %v1773 = vmul.f32 %v1564, %v1718
        %v1774 = vmul.f32 %v1566, %v1718
        %v1775 = vmul.f32 %v1568, %v1719
        %v1776 = vmul.f32 %v1570, %v1719
        %v1777 = vmul.f32 %v1572, %v1720
        %v1778 = vmul.f32 %v1574, %v1720
        %v1779 = vmul.f32 %v1576, %v1721
        %v1780 = vmul.f32 %v1578, %v1721
        %v1781 = vmul.f32 %v1580, %v1722
        %v1782 = vmul.f32 %v1582, %v1722
        %v1783 = vmul.f32 %v1584, %v1723
        %v1784 = vmul.f32 %v1586, %v1723
        %v1785 = vmul.f32 %v1588, %v1724
        %v1786 = vmul.f32 %v1590, %v1724
        %v1787 = vmul.f32 %v1592, %v1725
        %v1788 = vmul.f32 %v1594, %v1725
        %v1789 = vmul.f32 %v1596, %v1726
        %v1790 = vmul.f32 %v1598, %v1726
        %1791 = vst [vmem:[%s207] sm:$0xff] %v1727
        %1792 = vst [vmem:[%s207 + $0x8] sm:$0xff] %v1728
        %1793 = vst [vmem:[%s207 + $0x10] sm:$0xff] %v1729
        %1794 = vst [vmem:[%s207 + $0x18] sm:$0xff] %v1730
        %1795 = vst [vmem:[%s207 + $0x20] sm:$0xff] %v1731
        %1796 = vst [vmem:[%s207 + $0x28] sm:$0xff] %v1732
        %1797 = vst [vmem:[%s207 + $0x30] sm:$0xff] %v1733
        %1798 = vst [vmem:[%s207 + $0x38] sm:$0xff] %v1734
        %1799 = vst [vmem:[%s207 + $0x40] sm:$0xff] %v1735
        %1800 = vst [vmem:[%s207 + $0x48] sm:$0xff] %v1736
        %1801 = vst [vmem:[%s207 + $0x50] sm:$0xff] %v1737
        %1802 = vst [vmem:[%s207 + $0x58] sm:$0xff] %v1738
        %1803 = vst [vmem:[%s207 + $0x60] sm:$0xff] %v1739
        %1804 = vst [vmem:[%s207 + $0x68] sm:$0xff] %v1740
        %1805 = vst [vmem:[%s207 + $0x70] sm:$0xff] %v1741
        %1806 = vst [vmem:[%s207 + $0x78] sm:$0xff] %v1742
        %1807 = vst [vmem:[%s207 + $0x80] sm:$0xff] %v1743
        %1808 = vst [vmem:[%s207 + $0x88] sm:$0xff] %v1744
        %1809 = vst [vmem:[%s207 + $0x90] sm:$0xff] %v1745
        %1810 = vst [vmem:[%s207 + $0x98] sm:$0xff] %v1746
        %1811 = vst [vmem:[%s207 + $0xa0] sm:$0xff] %v1747
        %1812 = vst [vmem:[%s207 + $0xa8] sm:$0xff] %v1748
        %1813 = vst [vmem:[%s207 + $0xb0] sm:$0xff] %v1749
        %1814 = vst [vmem:[%s207 + $0xb8] sm:$0xff] %v1750
        %1815 = vst [vmem:[%s207 + $0xc0] sm:$0xff] %v1751
        %1816 = vst [vmem:[%s207 + $0xc8] sm:$0xff] %v1752
        %1817 = vst [vmem:[%s207 + $0xd0] sm:$0xff] %v1753
        %1818 = vst [vmem:[%s207 + $0xd8] sm:$0xff] %v1754
        %1819 = vst [vmem:[%s207 + $0xe0] sm:$0xff] %v1755
        %1820 = vst [vmem:[%s207 + $0xe8] sm:$0xff] %v1756
        %1821 = vst [vmem:[%s207 + $0xf0] sm:$0xff] %v1757
        %1822 = vst [vmem:[%s207 + $0xf8] sm:$0xff] %v1758
        %1823 = vst [vmem:[%s207 + $0x100] sm:$0xff] %v1759
        %1824 = vst [vmem:[%s207 + $0x108] sm:$0xff] %v1760
        %1825 = vst [vmem:[%s207 + $0x110] sm:$0xff] %v1761
        %1826 = vst [vmem:[%s207 + $0x118] sm:$0xff] %v1762
        %1827 = vst [vmem:[%s207 + $0x120] sm:$0xff] %v1763
        %1828 = vst [vmem:[%s207 + $0x128] sm:$0xff] %v1764
        %1829 = vst [vmem:[%s207 + $0x130] sm:$0xff] %v1765
        %1830 = vst [vmem:[%s207 + $0x138] sm:$0xff] %v1766
        %1831 = vst [vmem:[%s207 + $0x140] sm:$0xff] %v1767
        %1832 = vst [vmem:[%s207 + $0x148] sm:$0xff] %v1768
        %1833 = vst [vmem:[%s207 + $0x150] sm:$0xff] %v1769
        %1834 = vst [vmem:[%s207 + $0x158] sm:$0xff] %v1770
        %1835 = vst [vmem:[%s207 + $0x160] sm:$0xff] %v1771
        %1836 = vst [vmem:[%s207 + $0x168] sm:$0xff] %v1772
        %1837 = vst [vmem:[%s207 + $0x170] sm:$0xff] %v1773
        %1838 = vst [vmem:[%s207 + $0x178] sm:$0xff] %v1774
        %1839 = vst [vmem:[%s207 + $0x180] sm:$0xff] %v1775
        %1840 = vst [vmem:[%s207 + $0x188] sm:$0xff] %v1776
        %1841 = vst [vmem:[%s207 + $0x190] sm:$0xff] %v1777
        %1842 = vst [vmem:[%s207 + $0x198] sm:$0xff] %v1778
        %1843 = vst [vmem:[%s207 + $0x1a0] sm:$0xff] %v1779
        %1844 = vst [vmem:[%s207 + $0x1a8] sm:$0xff] %v1780
        %1845 = vst [vmem:[%s207 + $0x1b0] sm:$0xff] %v1781
        %1846 = vst [vmem:[%s207 + $0x1b8] sm:$0xff] %v1782
        %1847 = vst [vmem:[%s207 + $0x1c0] sm:$0xff] %v1783
        %1848 = vst [vmem:[%s207 + $0x1c8] sm:$0xff] %v1784
        %1849 = vst [vmem:[%s207 + $0x1d0] sm:$0xff] %v1785
        %1850 = vst [vmem:[%s207 + $0x1d8] sm:$0xff] %v1786
        %1851 = vst [vmem:[%s207 + $0x1e0] sm:$0xff] %v1787
        %1852 = vst [vmem:[%s207 + $0x1e8] sm:$0xff] %v1788
        %1853 = vst [vmem:[%s207 + $0x1f0] sm:$0xff] %v1789
        %1854 = vst [vmem:[%s207 + $0x1f8] sm:$0xff] %v1790
        %v1855 = vld [vmem:[#allocation4] sm:$0xff]
        %v1856 = vld [vmem:[#allocation4 + $0x8] sm:$0xff]
        %v1857 = vld [vmem:[#allocation4 + $0x10] sm:$0xff]
        %v1858 = vld [vmem:[#allocation4 + $0x18] sm:$0xff]
        %v1859 = vld [vmem:[#allocation4 + $0x20] sm:$0xff]
        %v1860 = vld [vmem:[#allocation4 + $0x28] sm:$0xff]
        %v1861 = vld [vmem:[#allocation4 + $0x30] sm:$0xff]
        %v1862 = vld [vmem:[#allocation4 + $0x38] sm:$0xff]
        %v1863 = vld [vmem:[#allocation4 + $0x40] sm:$0xff]
        %v1864 = vld [vmem:[#allocation4 + $0x48] sm:$0xff]
        %v1865 = vld [vmem:[#allocation4 + $0x50] sm:$0xff]
        %v1866 = vld [vmem:[#allocation4 + $0x58] sm:$0xff]
        %v1867 = vld [vmem:[#allocation4 + $0x60] sm:$0xff]
        %v1868 = vld [vmem:[#allocation4 + $0x68] sm:$0xff]
        %v1869 = vld [vmem:[#allocation4 + $0x70] sm:$0xff]
        %v1870 = vld [vmem:[#allocation4 + $0x78] sm:$0xff]
        %v1871 = vld [vmem:[#allocation4 + $0x80] sm:$0xff]
        %v1872 = vld [vmem:[#allocation4 + $0x88] sm:$0xff]
        %v1873 = vld [vmem:[#allocation4 + $0x90] sm:$0xff]
        %v1874 = vld [vmem:[#allocation4 + $0x98] sm:$0xff]
        %v1875 = vld [vmem:[#allocation4 + $0xa0] sm:$0xff]
        %v1876 = vld [vmem:[#allocation4 + $0xa8] sm:$0xff]
        %v1877 = vld [vmem:[#allocation4 + $0xb0] sm:$0xff]
        %v1878 = vld [vmem:[#allocation4 + $0xb8] sm:$0xff]
        %v1879 = vld [vmem:[#allocation4 + $0xc0] sm:$0xff]
        %v1880 = vld [vmem:[#allocation4 + $0xc8] sm:$0xff]
        %v1881 = vld [vmem:[#allocation4 + $0xd0] sm:$0xff]
        %v1882 = vld [vmem:[#allocation4 + $0xd8] sm:$0xff]
        %v1883 = vld [vmem:[#allocation4 + $0xe0] sm:$0xff]
        %v1884 = vld [vmem:[#allocation4 + $0xe8] sm:$0xff]
        %v1885 = vld [vmem:[#allocation4 + $0xf0] sm:$0xff]
        %v1886 = vld [vmem:[#allocation4 + $0xf8] sm:$0xff]
        %1887 = vmatprep.subr.mxu0 0.0
        %1888 = vmatpush1.msra.mxu0 %v1870
        %1889 = vmatprep.subr.mxu0 0.0
        %1890 = vmatpush1.msra.mxu0 %v1869
        %1891 = vmatprep.subr.mxu0 0.0
        %1892 = vmatpush1.msra.mxu0 %v1868
        %1893 = vmatprep.subr.mxu0 0.0
        %1894 = vmatpush1.msra.mxu0 %v1867
        %1895 = vmatprep.subr.mxu0 0.0
        %1896 = vmatpush1.msra.mxu0 %v1866
        %1897 = vmatprep.subr.mxu0 0.0
        %1898 = vmatpush1.msra.mxu0 %v1865
        %1899 = vmatprep.subr.mxu0 0.0
        %1900 = vmatpush1.msra.mxu0 %v1864
        %1901 = vmatprep.subr.mxu0 0.0
        %1902 = vmatpush1.msra.mxu0 %v1863
        %1903 = vmatprep.subr.mxu0 0.0
        %1904 = vmatpush1.msra.mxu0 %v1862
        %1905 = vmatprep.subr.mxu0 0.0
        %1906 = vmatpush1.msra.mxu0 %v1861
        %1907 = vmatprep.subr.mxu0 0.0
        %1908 = vmatpush1.msra.mxu0 %v1860
        %1909 = vmatprep.subr.mxu0 0.0
        %1910 = vmatpush1.msra.mxu0 %v1859
        %1911 = vmatprep.subr.mxu0 0.0
        %1912 = vmatpush1.msra.mxu0 %v1858
        %1913 = vmatprep.subr.mxu0 0.0
        %1914 = vmatpush1.msra.mxu0 %v1857
        %1915 = vmatprep.subr.mxu0 0.0
        %1916 = vmatpush1.msra.mxu0 %v1856
        %1917 = vmatprep.subr.mxu0 0.0
        %1918 = vmatpush1.msra.mxu0 %v1855
        %1919 = vmatprep.subr.mxu0 0.0
        %1920 = vmatpush2.msra.mxu0 %v1886
        %1921 = vmatprep.subr.mxu0 0.0
        %1922 = vmatpush2.msra.mxu0 %v1885
        %1923 = vmatprep.subr.mxu0 0.0
        %1924 = vmatpush2.msra.mxu0 %v1884
        %1925 = vmatprep.subr.mxu0 0.0
        %1926 = vmatpush2.msra.mxu0 %v1883
        %1927 = vmatprep.subr.mxu0 0.0
        %1928 = vmatpush2.msra.mxu0 %v1882
        %1929 = vmatprep.subr.mxu0 0.0
        %1930 = vmatpush2.msra.mxu0 %v1881
        %1931 = vmatprep.subr.mxu0 0.0
        %1932 = vmatpush2.msra.mxu0 %v1880
        %1933 = vmatprep.subr.mxu0 0.0
        %1934 = vmatpush2.msra.mxu0 %v1879
        %1935 = vmatprep.subr.mxu0 0.0
        %1936 = vmatpush2.msra.mxu0 %v1878
        %1937 = vmatprep.subr.mxu0 0.0
        %1938 = vmatpush2.msra.mxu0 %v1877
        %1939 = vmatprep.subr.mxu0 0.0
        %1940 = vmatpush2.msra.mxu0 %v1876
        %1941 = vmatprep.subr.mxu0 0.0
        %1942 = vmatpush2.msra.mxu0 %v1875
        %1943 = vmatprep.subr.mxu0 0.0
        %1944 = vmatpush2.msra.mxu0 %v1874
        %1945 = vmatprep.subr.mxu0 0.0
        %1946 = vmatpush2.msra.mxu0 %v1873
        %1947 = vmatprep.subr.mxu0 0.0
        %1948 = vmatpush2.msra.mxu0 %v1872
        %1949 = vmatprep.subr.mxu0 0.0
        %1950 = vmatpush2.msra.mxu0 %v1871
        %1951 = vmatprep.mubr.f32.mxu0 %v1728
        %1952 = vmatmul.mubr.f32.gmra.mxu0 %v1727
        %v1953 = vpop.f32.mrf.mxu0
        %v1954 = vadd.f32 0.0, %v1953
        %v1955 = vpop.f32.mrf.mxu0
        %1956 = vmatprep.mubr.f32.mxu0 %v1730
        %1957 = vmatmul.mubr.f32.gmra.mxu0 %v1729
        %v1958 = vpop.f32.mrf.mxu0
        %v1959 = vadd.f32 0.0, %v1958
        %v1960 = vpop.f32.mrf.mxu0
        %1961 = vmatprep.mubr.f32.mxu0 %v1732
        %1962 = vmatmul.mubr.f32.gmra.mxu0 %v1731
        %v1963 = vpop.f32.mrf.mxu0
        %v1964 = vadd.f32 0.0, %v1963
        %v1965 = vpop.f32.mrf.mxu0
        %1966 = vmatprep.mubr.f32.mxu0 %v1734
        %1967 = vmatmul.mubr.f32.gmra.mxu0 %v1733
        %v1968 = vpop.f32.mrf.mxu0
        %v1969 = vadd.f32 0.0, %v1968
        %v1970 = vpop.f32.mrf.mxu0
        %1971 = vmatprep.mubr.f32.mxu0 %v1736
        %1972 = vmatmul.mubr.f32.gmra.mxu0 %v1735
        %v1973 = vpop.f32.mrf.mxu0
        %v1974 = vadd.f32 0.0, %v1973
        %v1975 = vpop.f32.mrf.mxu0
        %1976 = vmatprep.mubr.f32.mxu0 %v1738
        %1977 = vmatmul.mubr.f32.gmra.mxu0 %v1737
        %v1978 = vpop.f32.mrf.mxu0
        %v1979 = vadd.f32 0.0, %v1978
        %v1980 = vpop.f32.mrf.mxu0
        %1981 = vmatprep.mubr.f32.mxu0 %v1740
        %1982 = vmatmul.mubr.f32.gmra.mxu0 %v1739
        %v1983 = vpop.f32.mrf.mxu0
        %v1984 = vadd.f32 0.0, %v1983
        %v1985 = vpop.f32.mrf.mxu0
        %1986 = vmatprep.mubr.f32.mxu0 %v1742
        %1987 = vmatmul.mubr.f32.gmra.mxu0 %v1741
        %v1988 = vpop.f32.mrf.mxu0
        %v1989 = vadd.f32 0.0, %v1988
        %v1990 = vpop.f32.mrf.mxu0
        %1991 = vmatprep.mubr.f32.mxu0 %v1744
        %1992 = vmatmul.mubr.f32.gmra.mxu0 %v1743
        %v1993 = vpop.f32.mrf.mxu0
        %v1994 = vadd.f32 0.0, %v1993
        %v1995 = vpop.f32.mrf.mxu0
        %1996 = vmatprep.mubr.f32.mxu0 %v1746
        %1997 = vmatmul.mubr.f32.gmra.mxu0 %v1745
        %v1998 = vpop.f32.mrf.mxu0
        %v1999 = vadd.f32 0.0, %v1998
        %v2000 = vpop.f32.mrf.mxu0
        %2001 = vmatprep.mubr.f32.mxu0 %v1748
        %2002 = vmatmul.mubr.f32.gmra.mxu0 %v1747
        %v2003 = vpop.f32.mrf.mxu0
        %v2004 = vadd.f32 0.0, %v2003
        %v2005 = vpop.f32.mrf.mxu0
        %2006 = vmatprep.mubr.f32.mxu0 %v1750
        %2007 = vmatmul.mubr.f32.gmra.mxu0 %v1749
        %v2008 = vpop.f32.mrf.mxu0
        %v2009 = vadd.f32 0.0, %v2008
        %v2010 = vpop.f32.mrf.mxu0
        %2011 = vmatprep.mubr.f32.mxu0 %v1752
        %2012 = vmatmul.mubr.f32.gmra.mxu0 %v1751
        %v2013 = vpop.f32.mrf.mxu0
        %v2014 = vadd.f32 0.0, %v2013
        %v2015 = vpop.f32.mrf.mxu0
        %2016 = vmatprep.mubr.f32.mxu0 %v1754
        %2017 = vmatmul.mubr.f32.gmra.mxu0 %v1753
        %v2018 = vpop.f32.mrf.mxu0
        %v2019 = vadd.f32 0.0, %v2018
        %v2020 = vpop.f32.mrf.mxu0
        %2021 = vmatprep.mubr.f32.mxu0 %v1756
        %2022 = vmatmul.mubr.f32.gmra.mxu0 %v1755
        %v2023 = vpop.f32.mrf.mxu0
        %v2024 = vadd.f32 0.0, %v2023
        %v2025 = vpop.f32.mrf.mxu0
        %2026 = vmatprep.mubr.f32.mxu0 %v1758
        %2027 = vmatmul.mubr.f32.gmra.mxu0 %v1757
        %v2028 = vpop.f32.mrf.mxu0
        %v2029 = vadd.f32 0.0, %v2028
        %v2030 = vpop.f32.mrf.mxu0
        %2031 = vmatprep.mubr.f32.mxu0 %v1760
        %2032 = vmatmul.mubr.f32.gmra.mxu0 %v1759
        %v2033 = vpop.f32.mrf.mxu0
        %v2034 = vadd.f32 0.0, %v2033
        %v2035 = vpop.f32.mrf.mxu0
        %2036 = vmatprep.mubr.f32.mxu0 %v1762
        %2037 = vmatmul.mubr.f32.gmra.mxu0 %v1761
        %v2038 = vpop.f32.mrf.mxu0
        %v2039 = vadd.f32 0.0, %v2038
        %v2040 = vpop.f32.mrf.mxu0
        %2041 = vmatprep.mubr.f32.mxu0 %v1764
        %2042 = vmatmul.mubr.f32.gmra.mxu0 %v1763
        %v2043 = vpop.f32.mrf.mxu0
        %v2044 = vadd.f32 0.0, %v2043
        %v2045 = vpop.f32.mrf.mxu0
        %2046 = vmatprep.mubr.f32.mxu0 %v1766
        %2047 = vmatmul.mubr.f32.gmra.mxu0 %v1765
        %v2048 = vpop.f32.mrf.mxu0
        %v2049 = vadd.f32 0.0, %v2048
        %v2050 = vpop.f32.mrf.mxu0
        %2051 = vmatprep.mubr.f32.mxu0 %v1768
        %2052 = vmatmul.mubr.f32.gmra.mxu0 %v1767
        %v2053 = vpop.f32.mrf.mxu0
        %v2054 = vadd.f32 0.0, %v2053
        %v2055 = vpop.f32.mrf.mxu0
        %2056 = vmatprep.mubr.f32.mxu0 %v1770
        %2057 = vmatmul.mubr.f32.gmra.mxu0 %v1769
        %v2058 = vpop.f32.mrf.mxu0
        %v2059 = vadd.f32 0.0, %v2058
        %v2060 = vpop.f32.mrf.mxu0
        %2061 = vmatprep.mubr.f32.mxu0 %v1772
        %2062 = vmatmul.mubr.f32.gmra.mxu0 %v1771
        %v2063 = vpop.f32.mrf.mxu0
        %v2064 = vadd.f32 0.0, %v2063
        %v2065 = vpop.f32.mrf.mxu0
        %2066 = vmatprep.mubr.f32.mxu0 %v1774
        %2067 = vmatmul.mubr.f32.gmra.mxu0 %v1773
        %v2068 = vpop.f32.mrf.mxu0
        %v2069 = vadd.f32 0.0, %v2068
        %v2070 = vpop.f32.mrf.mxu0
        %2071 = vmatprep.mubr.f32.mxu0 %v1776
        %2072 = vmatmul.mubr.f32.gmra.mxu0 %v1775
        %v2073 = vpop.f32.mrf.mxu0
        %v2074 = vadd.f32 0.0, %v2073
        %v2075 = vpop.f32.mrf.mxu0
        %2076 = vmatprep.mubr.f32.mxu0 %v1778
        %2077 = vmatmul.mubr.f32.gmra.mxu0 %v1777
        %v2078 = vpop.f32.mrf.mxu0
        %v2079 = vadd.f32 0.0, %v2078
        %v2080 = vpop.f32.mrf.mxu0
        %2081 = vmatprep.mubr.f32.mxu0 %v1780
        %2082 = vmatmul.mubr.f32.gmra.mxu0 %v1779
        %v2083 = vpop.f32.mrf.mxu0
        %v2084 = vadd.f32 0.0, %v2083
        %v2085 = vpop.f32.mrf.mxu0
        %2086 = vmatprep.mubr.f32.mxu0 %v1782
        %2087 = vmatmul.mubr.f32.gmra.mxu0 %v1781
        %v2088 = vpop.f32.mrf.mxu0
        %v2089 = vadd.f32 0.0, %v2088
        %v2090 = vpop.f32.mrf.mxu0
        %2091 = vmatprep.mubr.f32.mxu0 %v1784
        %2092 = vmatmul.mubr.f32.gmra.mxu0 %v1783
        %v2093 = vpop.f32.mrf.mxu0
        %v2094 = vadd.f32 0.0, %v2093
        %v2095 = vpop.f32.mrf.mxu0
        %2096 = vmatprep.mubr.f32.mxu0 %v1786
        %2097 = vmatmul.mubr.f32.gmra.mxu0 %v1785
        %v2098 = vpop.f32.mrf.mxu0
        %v2099 = vadd.f32 0.0, %v2098
        %v2100 = vpop.f32.mrf.mxu0
        %2101 = vmatprep.mubr.f32.mxu0 %v1788
        %2102 = vmatmul.mubr.f32.gmra.mxu0 %v1787
        %v2103 = vpop.f32.mrf.mxu0
        %v2104 = vadd.f32 0.0, %v2103
        %v2105 = vpop.f32.mrf.mxu0
        %2106 = vmatprep.mubr.f32.mxu0 %v1790
        %2107 = vmatmul.mubr.f32.gmra.mxu0 %v1789
        %v2108 = vpop.f32.mrf.mxu0
        %v2109 = vadd.f32 0.0, %v2108
        %v2110 = vpop.f32.mrf.mxu0
        %2111 = vdwg.mxu0
        %2112 = vst [vmem:[%s233] sm:$0xff] %v1954
        %2113 = vst [vmem:[%s233 + $0x8] sm:$0xff] %v1959
        %2114 = vst [vmem:[%s233 + $0x10] sm:$0xff] %v1964
        %2115 = vst [vmem:[%s233 + $0x18] sm:$0xff] %v1969
        %2116 = vst [vmem:[%s233 + $0x20] sm:$0xff] %v1974
        %2117 = vst [vmem:[%s233 + $0x28] sm:$0xff] %v1979
        %2118 = vst [vmem:[%s233 + $0x30] sm:$0xff] %v1984
        %2119 = vst [vmem:[%s233 + $0x38] sm:$0xff] %v1989
        %2120 = vst [vmem:[%s233 + $0x40] sm:$0xff] %v1994
        %2121 = vst [vmem:[%s233 + $0x48] sm:$0xff] %v1999
        %2122 = vst [vmem:[%s233 + $0x50] sm:$0xff] %v2004
        %2123 = vst [vmem:[%s233 + $0x58] sm:$0xff] %v2009
        %2124 = vst [vmem:[%s233 + $0x60] sm:$0xff] %v2014
        %2125 = vst [vmem:[%s233 + $0x68] sm:$0xff] %v2019
        %2126 = vst [vmem:[%s233 + $0x70] sm:$0xff] %v2024
        %2127 = vst [vmem:[%s233 + $0x78] sm:$0xff] %v2029
        %2128 = vst [vmem:[%s233 + $0x80] sm:$0xff] %v2034
        %2129 = vst [vmem:[%s233 + $0x88] sm:$0xff] %v2039
        %2130 = vst [vmem:[%s233 + $0x90] sm:$0xff] %v2044
        %2131 = vst [vmem:[%s233 + $0x98] sm:$0xff] %v2049
        %2132 = vst [vmem:[%s233 + $0xa0] sm:$0xff] %v2054
        %2133 = vst [vmem:[%s233 + $0xa8] sm:$0xff] %v2059
        %2134 = vst [vmem:[%s233 + $0xb0] sm:$0xff] %v2064
        %2135 = vst [vmem:[%s233 + $0xb8] sm:$0xff] %v2069
        %2136 = vst [vmem:[%s233 + $0xc0] sm:$0xff] %v2074
        %2137 = vst [vmem:[%s233 + $0xc8] sm:$0xff] %v2079
        %2138 = vst [vmem:[%s233 + $0xd0] sm:$0xff] %v2084
        %2139 = vst [vmem:[%s233 + $0xd8] sm:$0xff] %v2089
        %2140 = vst [vmem:[%s233 + $0xe0] sm:$0xff] %v2094
        %2141 = vst [vmem:[%s233 + $0xe8] sm:$0xff] %v2099
        %2142 = vst [vmem:[%s233 + $0xf0] sm:$0xff] %v2104
        %2143 = vst [vmem:[%s233 + $0xf8] sm:$0xff] %v2109
        %s2144 = sand.u32 %s109, 1
        %s2145 = scalar_lea.sflag [#allocation6], %s2144
        %s2146 = sand.u32 %s109, 1
        %s2147 = smul.addr %s2146, 512
        %s2148 = scalar_lea.vmem [#allocation5], %s2147
        %s2149 = smul.u32 32, %s24
        %p2150 = scmp.lt.s32.totalorder %s23, 1
        %s2151 = scalar_select %p2150, %s23, 1
        %p2152 = scmp.lt.s32.totalorder %s2149, 31
        %s2153 = scalar_select %p2152, %s2149, 31
        %s2154 = smul.addr %s2151, 32
        %s2155 = sadd.s32 %s2153, %s2154
        %s2156 = smul.addr %s2155, 8
        %s2157 = scalar_lea.vmem %s4, %s2156
        // Predicated region
        $region37: #{pca_projector.1} parent=31 // pred_check
          %p2158 = pneg %p119
        $region38: #{pca_projector.1} parent=31 // pred_check_branch
          %2160 = sbr.rel (%p2158) target = $region40
        $region39: #{pca_projector.1} parent=31 // pred_region
          %s2161 = smul.u32 32, %s24
          %s2163 = ssub.s32 8192, 8192
          %2164 = vsyncadd %s2145, %s2163
          %s2165 = smul.addr %s2161, 2
          %s2166 = smul.addr %s23, 64
          %s2167 = sadd.s32 %s2165, %s2166
          %s2168 = smul.addr %s2167, 128
          %s2169 = scalar_lea.hbm %s3, %s2168
          %s2170 = sshll.u32 %s2148, 4
          %s2171 = int_to_ptr.vmem [resolvable:$true] %s2170
          %2176 = dma.vmem_to_hbm [thread:$0]  %s2171, 8192, %s2169, %s2145, 256, 256, 16
        $region40: #{pca_projector.1} parent=31 // pred_fallthru
          _
        // Predicated region
        $region41: #{pca_projector.1} parent=31 // pred_check
          %p2177 = pneg %p147
        $region42: #{pca_projector.1} parent=31 // pred_check_branch
          %2179 = sbr.rel (%p2177) target = $region44
        $region43: #{pca_projector.1} parent=31 // pred_region
          %s2180 = smul.u32 32, %s24
        $region44: #{pca_projector.1} parent=31 // pred_fallthru
          _
      $region32: #{pca_projector.1} parent=5 // pred_fallthru
        _
      %p2181 = scmp.le.s32.totalorder 2, %s14
      // Predicated region
      $region45: #{pca_projector.1} parent=5 // pred_check
        %p2182 = pneg %p2181
      $region46: #{pca_projector.1} parent=5 // pred_check_branch
        %2184 = sbr.rel (%p2182) target = $region48
      $region47: #{pca_projector.1} parent=5 // pred_region
        %s2185 = ssub.s32 %s14, 2
        // Predicated region
        $region49: #{pca_projector.1} parent=47 // pred_check
          %p2186 = pneg %p125
        $region50: #{pca_projector.1} parent=47 // pred_check_branch
          %2188 = sbr.rel (%p2186) target = $region52
        $region51: #{pca_projector.1} parent=47 // pred_region
          %s2189 = sand.u32 %s110, 1
          %s2190 = scalar_lea.sflag [#allocation6], %s2189
          %s2191 = sand.u32 %s110, 1
          %s2192 = smul.addr %s2191, 512
          %s2193 = scalar_lea.vmem [#allocation5], %s2192
          %2194 = dma.done %s2190, 8192
        $region52: #{pca_projector.1} parent=47 // pred_fallthru
          _
        // Predicated region
        $region53: #{pca_projector.1} parent=47 // pred_check
          %p2195 = pneg %p153
        $region54: #{pca_projector.1} parent=47 // pred_check_branch
          %2197 = sbr.rel (%p2195) target = $region56
        $region55: #{pca_projector.1} parent=47 // pred_region
          %s2198 = smul.u32 32, %s26
          %p2199 = scmp.lt.s32.totalorder %s25, 1
          %s2200 = scalar_select %p2199, %s25, 1
          %p2201 = scmp.lt.s32.totalorder %s2198, 31
          %s2202 = scalar_select %p2201, %s2198, 31
          %s2203 = smul.addr %s2200, 32
          %s2204 = sadd.s32 %s2202, %s2203
          %s2205 = smul.addr %s2204, 8
          %s2206 = scalar_lea.vmem %s4, %s2205
        $region56: #{pca_projector.1} parent=47 // pred_fallthru
          _
      $region48: #{pca_projector.1} parent=5 // pred_fallthru
        _
    $region6: #{pca_projector.1} parent=1 // loop_footer
      %s18 = sadd.s32 1, %s14
    $region7: #{pca_projector.1} parent=1 // loop_footer_branch
      %13 = sbr.rel target = $region3
    $region8: #{pca_projector.1} parent=1 // loop_exit
      _
    %2207 = vsyncpa [#allocation6], 1
    %s2208 = scalar_lea.sflag [#allocation6], 1
    %2209 = vsyncpa %s2208, 1

</llo_original>
